<compile_context>
chip_gen: v6e
topology: v6e:2x2x1
jax: 0.10.0
libtpu: 0.0.40
codegen_flags: <defaults>
</compile_context>

<pallas_src>
import math
import functools

import numpy as np
import jax
import jax.numpy as jnp
from jax.experimental import pallas as pl
from jax.experimental.pallas import tpu as pltpu


def _pad8(n):
    return ((n + 7) // 8) * 8


# ----------------------------------------------------------------------------
# Fused kernel factory
# ----------------------------------------------------------------------------
def make_rast_kernel(*, n_hops, num_layers, S, B, H, E, N, input_dim):
    f32 = jnp.float32
    B2 = 2 * B
    inv_hops = 1.0 / float(n_hops + 1)
    inv_s = 1.0 / float(S)

    def kernel(adjw_ref, ego_ref, x_ref, idx_ref, *rest):
        lstm_refs = rest[:num_layers]
        whead_ref = rest[num_layers]
        merge_ref = rest[num_layers + 1]
        risk_ref = rest[num_layers + 2]

        # --------------------------------------------------------------
        # 1) gather-first GCN-style relation-weighted propagation:
        #    s_emb = (sel + sel A + ... + sel A^hops) @ ego / (hops+1)
        # TODO(synk): GraphConv class is not provided in the reference; this
        #             is a simplified dense propagation (edge types ignored).
        # --------------------------------------------------------------
        A = adjw_ref[...]                                   # (N, N)
        ego = ego_ref[...]                                  # (N, E)
        lane_n = jax.lax.broadcasted_iota(jnp.int32, (1, N), 1)
        sel = jnp.concatenate(
            [(lane_n == idx_ref[b]).astype(f32) for b in range(B)], axis=0)   # (B, N)
        r = sel
        racc = sel
        for _ in range(n_hops):                             # static hop count
            r = jnp.dot(r, A, preferred_element_type=f32)
            racc = racc + r
        s_emb = jnp.dot(racc, ego, preferred_element_type=f32) * inv_hops     # (B, E)

        # --------------------------------------------------------------
        # 2) BiLSTM encoder: fwd + bwd packed along rows, one matmul / step.
        #    x_ref rows are per-step blocks [x_t ; x_{S-1-t}] with a trailing
        #    ones column (biases folded into the projection weights).
        # --------------------------------------------------------------
        is_fwd = jax.lax.broadcasted_iota(jnp.int32, (B2, 1), 0) < B           # (2B, 1)
        g_lane = jax.lax.broadcasted_iota(jnp.int32, (B2, 4 * H), 1)
        g_mask = (g_lane >= 2 * H) & (g_lane < 3 * H)                          # tanh lanes

        x_flat = x_ref[...]                                 # (S*2B, DinP0)
        din = input_dim
        h_sum = None
        for layer in range(num_layers):
            dinp = _pad8(din + 1)
            lw = lstm_refs[layer][...]                      # (dinp + H, 8H)
            wih_aug = lw[0:dinp, :]
            whh = lw[dinp:dinp + H, :]

            # hoisted lane-full input projection, biases folded in
            gproj = jnp.dot(x_flat, wih_aug, preferred_element_type=f32)       # (S*2B, 8H)

            h = jnp.zeros((B2, H), f32)
            c = jnp.zeros((B2, H), f32)
            last = layer == num_layers - 1
            if last:
                h_sum = jnp.zeros((B2, H), f32)
            else:
                steps = []

            for t in range(S):                              # fully unrolled recurrence
                pre = gproj[t * B2:(t + 1) * B2, :] + jnp.dot(
                    h, whh, preferred_element_type=f32)                        # (2B, 8H)
                # valid gate lanes: 0:4H for fwd rows, 4H:8H for bwd rows
                valid = jnp.where(is_fwd, pre[:, :4 * H], pre[:, 4 * H:])      # (2B, 4H)
                acts = jnp.where(g_mask, jnp.tanh(valid), jax.nn.sigmoid(valid))
                i_g = acts[:, 0:H]
                f_g = acts[:, H:2 * H]
                g_g = acts[:, 2 * H:3 * H]
                o_g = acts[:, 3 * H:4 * H]
                c = f_g * c + i_g * g_g
                h = o_g * jnp.tanh(c)
                if last:
                    h_sum = h_sum + h                       # temporal mean, in-loop
                else:
                    steps.append(h)

            if not last:
                # TODO(synk): multi-layer input rebuild is the slow concat path;
                #             not exercised at num_layers == 1.
                din = 2 * H
                dinp_n = _pad8(din + 1)
                ones_col = jnp.ones((B, 1), f32)
                zpad = jnp.zeros((B, dinp_n - din - 1), f32)
                blocks = []
                for t in range(S):
                    hf_t = steps[t][0:B, :]
                    hb_t = steps[S - 1 - t][B:B2, :]
                    hf_r = steps[S - 1 - t][0:B, :]
                    hb_r = steps[t][B:B2, :]
                    inp_t = jnp.concatenate([hf_t, hb_t, ones_col, zpad], axis=-1)
                    inp_r = jnp.concatenate([hf_r, hb_r, ones_col, zpad], axis=-1)
                    blocks.append(jnp.concatenate([inp_t, inp_r], axis=0))
                x_flat = jnp.concatenate(blocks, axis=0)     # (S*2B, dinp_n)

        # temporal mean over the sequence == encoded_output.mean(dim=1)
        t_emb = jnp.concatenate([h_sum[0:B, :], h_sum[B:B2, :]], axis=-1) * inv_s   # (B, 2H)

        # --------------------------------------------------------------
        # 3) gated fusion + risk projector (feature sum folded into weights)
        # --------------------------------------------------------------
        Wh = whead_ref[...]                                 # (E+1, 4E)
        wg_s = Wh[0:E, 0:E]
        wg_t = Wh[0:E, E:2 * E]
        w1 = Wh[0:E, 2 * E:3 * E]
        w2v = Wh[0:E, 3 * E:3 * E + 1]                      # (E, 1) = W2^T @ ones
        bg = Wh[E:E + 1, 0:E]
        b1 = Wh[E:E + 1, E:2 * E]
        b2s = Wh[E:E + 1, 2 * E:2 * E + 1]                  # (1, 1) = sum(b2)

        gate = jax.nn.sigmoid(jnp.dot(s_emb, wg_s, preferred_element_type=f32)
                              + jnp.dot(t_emb, wg_t, preferred_element_type=f32)
                              + bg)
        merge = gate * s_emb + (1.0 - gate) * t_emb
        h1 = jnp.tanh(jnp.dot(merge, w1, preferred_element_type=f32) + b1)
        risk = jax.nn.sigmoid(jnp.dot(h1, w2v, preferred_element_type=f32) + b2s)

        merge_ref[...] = merge
        risk_ref[...] = risk

    return kernel


# ----------------------------------------------------------------------------
# Wrapper: one grid-less pallas_call, everything whole-array resident in VMEM
# ----------------------------------------------------------------------------
def rast_eval_forward(params, adj_w, kg_init, inputs, node_indexes, *, n_hops):
    B, S, Din = inputs.shape
    N, E = kg_init.shape
    num_layers = len(params["lstm"])
    H = params["lstm"][0].shape[-1] // 8
    assert 2 * H == E, "fusion stage requires 2*bilstm_hidden_size == embedding_dim"

    # per-forward glue: per-step [x_t ; x_{S-1-t}] row blocks + ones bias column
    dinp0 = _pad8(Din + 1)
    xf = jnp.transpose(inputs, (1, 0, 2))                                  # (S, B, Din)
    x_pk = jnp.concatenate([xf, xf[::-1]], axis=1).reshape(S * 2 * B, Din)
    x_aug = jnp.zeros((S * 2 * B, dinp0), jnp.float32)
    x_aug = x_aug.at[:, :Din].set(x_pk).at[:, Din].set(1.0)

    idx = jnp.clip(node_indexes.astype(jnp.int32), 0, N - 1).reshape(B)    # bounds-safe

    kernel = make_rast_kernel(n_hops=n_hops, num_layers=num_layers,
                              S=S, B=B, H=H, E=E, N=N, input_dim=Din)
    vmem = pl.BlockSpec(memory_space=pltpu.MemorySpace.VMEM)
    smem = pl.BlockSpec(memory_space=pltpu.MemorySpace.SMEM)

    merge, risk = pl.pallas_call(
        kernel,
        out_shape=(jax.ShapeDtypeStruct((B, E), jnp.float32),
                   jax.ShapeDtypeStruct((B, 1), jnp.float32)),
        in_specs=[vmem, vmem, vmem, smem] + [vmem] * num_layers + [vmem],
        out_specs=(vmem, vmem),
    )(adj_w, kg_init, x_aug, idx, *params["lstm"], params["w_head"])

    return risk[:, 0], merge

    # TODO(synk): train path (decoder LSTM fed with encoder (h,c), MSE/BCE/L2
    #             losses) is shape-inconsistent in the reference and omitted.


# ----------------------------------------------------------------------------
# Parameter packing / graph setup (glue, deterministic, done once at init)
# ----------------------------------------------------------------------------
def xavier_uniform(key, shape):
    fan_out, fan_in = shape
    bound = math.sqrt(6.0 / (fan_in + fan_out))
    return jax.random.uniform(key, shape, jnp.float32, -bound, bound)


def linear_params(key, d_in, d_out):
    k = 1.0 / math.sqrt(d_in)
    k1, k2 = jax.random.split(key)
    W = jax.random.uniform(k1, (d_out, d_in), jnp.float32, -k, k)
    b = jax.random.uniform(k2, (d_out,), jnp.float32, -k, k)
    return W, b


def lstm_dir_raw(key, d_in, H):
    k = 1.0 / math.sqrt(H)
    ks = jax.random.split(key, 4)
    w_ih = jax.random.uniform(ks[0], (4 * H, d_in), jnp.float32, -k, k)
    w_hh = jax.random.uniform(ks[1], (4 * H, H), jnp.float32, -k, k)
    b_ih = jax.random.uniform(ks[2], (4 * H,), jnp.float32, -k, k)
    b_hh = jax.random.uniform(ks[3], (4 * H,), jnp.float32, -k, k)
    return w_ih, w_hh, b_ih + b_hh


def pack_bilstm_layer(raw_f, raw_b, d_in, H):
    """One lane-dense (DinP + H, 8H) array per layer:
       rows [0:d_in]      : [Wih_f^T | Wih_b^T]   (gate order i,f,g,o per dir)
       row  [d_in]        : [b_f | b_b]           (bias folded via ones column)
       rows [d_in+1:DinP] : zero contraction padding
       rows [DinP:DinP+H] : [Whh_f^T | Whh_b^T]
    """
    wih_f, whh_f, b_f = raw_f
    wih_b, whh_b, b_b = raw_b
    dinp = _pad8(d_in + 1)
    wih_all = jnp.concatenate([wih_f.T, wih_b.T], axis=1)               # (d_in, 8H)
    b_all = jnp.concatenate([b_f, b_b]).reshape(1, 8 * H)               # (1, 8H)
    pad = jnp.zeros((dinp - d_in - 1, 8 * H), jnp.float32)
    whh_pack = jnp.concatenate([whh_f.T, whh_b.T], axis=1)              # (H, 8H)
    return jnp.concatenate([wih_all, b_all, pad, whh_pack], axis=0)     # (dinp+H, 8H)


def pack_head(Wg, bg, W1, b1, W2, b2, E):
    """One lane-dense (E+1, 4E) array:
       rows 0:E : [Wg_s | Wg_t | W1^T | (W2^T @ 1) zero-padded]
       row  E   : [bg   | b1   | sum(b2), zeros]
    """
    wg_T = Wg.T                                                         # (2E, E)
    w2v = W2.T.sum(axis=1, keepdims=True)                               # (E, 1)
    w2_blk = jnp.concatenate([w2v, jnp.zeros((E, E - 1), jnp.float32)], axis=1)
    w_rows = jnp.concatenate([wg_T[:E], wg_T[E:], W1.T, w2_blk], axis=1)        # (E, 4E)
    bias_row = jnp.concatenate(
        [bg.reshape(1, E), b1.reshape(1, E), b2.sum().reshape(1, 1),
         jnp.zeros((1, 2 * E - 1), jnp.float32)], axis=1)                       # (1, 4E)
    return jnp.concatenate([w_rows, bias_row], axis=0)                          # (E+1, 4E)


def laplace_position_encoding(adj_np, k):
    deg = adj_np.sum(axis=1)
    d_inv_sqrt = np.where(deg > 0, deg ** -0.5, 0.0)
    lap = np.eye(adj_np.shape[0], dtype=np.float32) - \
        (d_inv_sqrt[:, None] * adj_np * d_inv_sqrt[None, :])
    # TODO(synk): reference uses scipy.sparse.linalg.eigsh('SM'); dense eigh
    #             (ascending eigenvalues -> first k columns) used here.
    _, eigvecs = np.linalg.eigh(lap.astype(np.float64))
    return jnp.asarray(eigvecs[:, :k], dtype=jnp.float32)


# ----------------------------------------------------------------------------
# Pure-JAX reference (unpacked params) for a correctness sanity check
# ----------------------------------------------------------------------------
def reference_forward(raw_layers, head_raw, adj_w, kg_init, inputs, node_indexes, n_hops):
    Wg, bg, W1, b1, W2, b2 = head_raw
    h = kg_init
    acc = h
    for _ in range(n_hops):
        h = adj_w @ h
        acc = acc + h
    s_emb = (acc / (n_hops + 1))[node_indexes]

    B, S, _ = inputs.shape
    seq = jnp.transpose(inputs, (1, 0, 2))          # (S, B, Din)
    for raw_f, raw_b in raw_layers:
        def run(xs, wih, whh, b):
            Hh = whh.shape[1]
            hh = jnp.zeros((B, Hh)); cc = jnp.zeros((B, Hh)); outs = []
            for t in range(xs.shape[0]):
                g = xs[t] @ wih.T + hh @ whh.T + b
                i_, f_, g_, o_ = jnp.split(g, 4, axis=-1)
                cc = jax.nn.sigmoid(f_) * cc + jax.nn.sigmoid(i_) * jnp.tanh(g_)
                hh = jax.nn.sigmoid(o_) * jnp.tanh(cc)
                outs.append(hh)
            return outs
        of = run(seq, *raw_f)
        ob = run(seq[::-1], *raw_b)[::-1]
        seq = jnp.stack([jnp.concatenate([of[t], ob[t]], axis=-1) for t in range(S)])
    t_emb = seq.mean(axis=0)

    cat = jnp.concatenate([s_emb, t_emb], axis=-1)
    gate = jax.nn.sigmoid(cat @ Wg.T + bg)
    merge = gate * s_emb + (1.0 - gate) * t_emb
    h1 = jnp.tanh(merge @ W1.T + b1)
    risk = jax.nn.sigmoid((h1 @ W2.T + b2).sum(axis=-1))
    return risk, merge


# ----------------------------------------------------------------------------
if __name__ == "__main__":
    N_NODES = 32          # data.n_nodes
    EMBED_DIM = 32        # args.embedding_dim
    LPE_DIM = 4           # args.lpe_dim
    HIDDEN = 16           # args.bilstm_hidden_size (2*HIDDEN == EMBED_DIM)
    NUM_LAYERS = 1        # args.bilstm_num_layers
    HOPS = 2              # args.context_hops
    INPUT_DIM = 8         # args.input_dim
    BATCH, SEQ = 4, 8
    assert 2 * HIDDEN == EMBED_DIM

    key = jax.random.PRNGKey(0)
    keys = jax.random.split(key, 16)

    # synthetic KG graph (ring + chords), symmetric
    adj_np = np.zeros((N_NODES, N_NODES), dtype=np.float32)
    for i in range(N_NODES):
        for j in (i + 1, i + 5):
            jj = j % N_NODES
            adj_np[i, jj] = 1.0
            adj_np[jj, i] = 1.0

    kg_lpe = laplace_position_encoding(adj_np, LPE_DIM)                        # (N, lpe)
    random_init = xavier_uniform(keys[0], (N_NODES, EMBED_DIM - LPE_DIM))      # (N, E-lpe)
    kg_init = jnp.concatenate([random_init, kg_lpe], axis=1)                   # (N, E)

    kg_relation_weight = xavier_uniform(keys[1], (N_NODES, N_NODES))
    deg = jnp.asarray(adj_np.sum(axis=1))
    adj_w = jnp.asarray(adj_np) * kg_relation_weight / jnp.maximum(deg, 1.0)[:, None]

    # BiLSTM encoder parameters: packed for the kernel + raw for the reference
    lstm_packed, lstm_raw = [], []
    d_in = INPUT_DIM
    for l in range(NUM_LAYERS):
        kf, kb = jax.random.split(keys[2 + l])
        raw_f = lstm_dir_raw(kf, d_in, HIDDEN)
        raw_b = lstm_dir_raw(kb, d_in, HIDDEN)
        lstm_packed.append(pack_bilstm_layer(raw_f, raw_b, d_in, HIDDEN))
        lstm_raw.append((raw_f, raw_b))
        d_in = 2 * HIDDEN

    # gate network + risk projector parameters
    Wg, bg = linear_params(keys[8], 2 * EMBED_DIM, EMBED_DIM)
    W1, b1 = linear_params(keys[9], EMBED_DIM, EMBED_DIM)
    W2, b2 = linear_params(keys[10], EMBED_DIM, EMBED_DIM)

    params = {"lstm": lstm_packed,
              "w_head": pack_head(Wg, bg, W1, b1, W2, b2, EMBED_DIM)}

    # example inputs
    inputs = jax.random.normal(keys[11], (BATCH, SEQ, INPUT_DIM), jnp.float32)
    node_indexes = jnp.array([0, 5, 10, 20], dtype=jnp.int32)

    fwd = jax.jit(functools.partial(rast_eval_forward, n_hops=HOPS))
    risk_score, node_merge_emb = fwd(params, adj_w, kg_init, inputs, node_indexes)
    jax.block_until_ready(risk_score)
    jax.block_until_ready(node_merge_emb)

    assert risk_score.shape == (BATCH,)
    assert node_merge_emb.shape == (BATCH, EMBED_DIM)

    # pure-JAX reference check (loose tolerance covers MXU matmul pass modes)
    risk_expect, merge_expect = reference_forward(
        lstm_raw, (Wg, bg, W1, b1, W2, b2), adj_w, kg_init, inputs,
        node_indexes, HOPS)
    np.testing.assert_allclose(np.asarray(risk_score), np.asarray(risk_expect),
                               rtol=2e-2, atol=2e-2)
    np.testing.assert_allclose(np.asarray(node_merge_emb), np.asarray(merge_expect),
                               rtol=2e-2, atol=2e-2)

    print("KERNEL_OK")
</pallas_src>

<mosaic_0001>
module attributes {stable_mosaic.version = 11 : i64} {
  func.func @kernel(%arg0: memref<32x32xf32, #tpu.memory_space<vmem>>, %arg1: memref<32x32xf32, #tpu.memory_space<vmem>>, %arg2: memref<64x16xf32, #tpu.memory_space<vmem>>, %arg3: memref<4xi32, #tpu.memory_space<smem>>, %arg4: memref<32x128xf32, #tpu.memory_space<vmem>>, %arg5: memref<33x128xf32, #tpu.memory_space<vmem>>, %arg6: memref<4x32xf32, #tpu.memory_space<vmem>>, %arg7: memref<4x1xf32, #tpu.memory_space<vmem>>) attributes {dimension_semantics = [], scalar_prefetch = 0 : i64, scratch_operands = 0 : i64, tpu.core_type = #tpu.core_type<tc>} {
    %c0 = arith.constant 0 : index
    %c0_0 = arith.constant 0 : index
    %0 = vector.load %arg0[%c0, %c0_0] : memref<32x32xf32, #tpu.memory_space<vmem>>, vector<32x32xf32>
    %c0_1 = arith.constant 0 : index
    %c0_2 = arith.constant 0 : index
    %1 = vector.load %arg1[%c0_1, %c0_2] : memref<32x32xf32, #tpu.memory_space<vmem>>, vector<32x32xf32>
    %2 = tpu.iota {dimensions = array<i32: 1>} : vector<1x32xi32>
    %c0_3 = arith.constant 0 : index
    %3 = memref.load %arg3[%c0_3] : memref<4xi32, #tpu.memory_space<smem>>
    %4 = vector.broadcast %3 : i32 to vector<1x32xi32>
    %5 = arith.cmpi eq, %2, %4 : vector<1x32xi32>
    %6 = arith.extui %5 : vector<1x32xi1> to vector<1x32xi32>
    %7 = arith.sitofp %6 : vector<1x32xi32> to vector<1x32xf32>
    %c1 = arith.constant 1 : index
    %8 = memref.load %arg3[%c1] : memref<4xi32, #tpu.memory_space<smem>>
    %9 = vector.broadcast %8 : i32 to vector<1x32xi32>
    %10 = arith.cmpi eq, %2, %9 : vector<1x32xi32>
    %11 = arith.extui %10 : vector<1x32xi1> to vector<1x32xi32>
    %12 = arith.sitofp %11 : vector<1x32xi32> to vector<1x32xf32>
    %c2 = arith.constant 2 : index
    %13 = memref.load %arg3[%c2] : memref<4xi32, #tpu.memory_space<smem>>
    %14 = vector.broadcast %13 : i32 to vector<1x32xi32>
    %15 = arith.cmpi eq, %2, %14 : vector<1x32xi32>
    %16 = arith.extui %15 : vector<1x32xi1> to vector<1x32xi32>
    %17 = arith.sitofp %16 : vector<1x32xi32> to vector<1x32xf32>
    %c3 = arith.constant 3 : index
    %18 = memref.load %arg3[%c3] : memref<4xi32, #tpu.memory_space<smem>>
    %19 = vector.broadcast %18 : i32 to vector<1x32xi32>
    %20 = arith.cmpi eq, %2, %19 : vector<1x32xi32>
    %21 = arith.extui %20 : vector<1x32xi1> to vector<1x32xi32>
    %22 = arith.sitofp %21 : vector<1x32xi32> to vector<1x32xf32>
    %23 = tpu.concatenate %7, %12, %17, %22 in 0 : vector<1x32xf32>, vector<1x32xf32>, vector<1x32xf32>, vector<1x32xf32> -> vector<4x32xf32>
    %cst = arith.constant dense<0.000000e+00> : vector<4x32xf32>
    %24 = tpu.matmul %23, %0, %cst {dimension_numbers = #tpu.dot_dimension_numbers<[1], [0], [0], [1], [0, 0, 1, 1], [], []>} : vector<4x32xf32>, vector<32x32xf32>, vector<4x32xf32> -> vector<4x32xf32>
    %25 = arith.addf %23, %24 : vector<4x32xf32>
    %cst_4 = arith.constant dense<0.000000e+00> : vector<4x32xf32>
    %26 = tpu.matmul %24, %0, %cst_4 {dimension_numbers = #tpu.dot_dimension_numbers<[1], [0], [0], [1], [0, 0, 1, 1], [], []>} : vector<4x32xf32>, vector<32x32xf32>, vector<4x32xf32> -> vector<4x32xf32>
    %27 = arith.addf %25, %26 : vector<4x32xf32>
    %cst_5 = arith.constant dense<0.000000e+00> : vector<4x32xf32>
    %28 = tpu.matmul %27, %1, %cst_5 {dimension_numbers = #tpu.dot_dimension_numbers<[1], [0], [0], [1], [0, 0, 1, 1], [], []>} : vector<4x32xf32>, vector<32x32xf32>, vector<4x32xf32> -> vector<4x32xf32>
    %cst_6 = arith.constant 0.333333343 : f32
    %29 = vector.broadcast %cst_6 : f32 to vector<4x32xf32>
    %30 = arith.mulf %28, %29 : vector<4x32xf32>
    %31 = tpu.iota {dimensions = array<i32: 0>} : vector<8x1xi32>
    %c4_i32 = arith.constant 4 : i32
    %32 = vector.broadcast %c4_i32 : i32 to vector<8x1xi32>
    %33 = arith.cmpi slt, %31, %32 : vector<8x1xi32>
    %34 = tpu.iota {dimensions = array<i32: 1>} : vector<8x64xi32>
    %c32_i32 = arith.constant 32 : i32
    %35 = vector.broadcast %c32_i32 : i32 to vector<8x64xi32>
    %36 = arith.cmpi sge, %34, %35 : vector<8x64xi32>
    %c48_i32 = arith.constant 48 : i32
    %37 = vector.broadcast %c48_i32 : i32 to vector<8x64xi32>
    %38 = arith.cmpi slt, %34, %37 : vector<8x64xi32>
    %39 = arith.andi %36, %38 : vector<8x64xi1>
    %c0_7 = arith.constant 0 : index
    %c0_8 = arith.constant 0 : index
    %40 = vector.load %arg2[%c0_7, %c0_8] : memref<64x16xf32, #tpu.memory_space<vmem>>, vector<64x16xf32>
    %c0_9 = arith.constant 0 : index
    %c0_10 = arith.constant 0 : index
    %41 = vector.load %arg4[%c0_9, %c0_10] : memref<32x128xf32, #tpu.memory_space<vmem>>, vector<32x128xf32>
    %42 = vector.extract_strided_slice %41 {offsets = [0, 0], sizes = [16, 128], strides = [1, 1]} : vector<32x128xf32> to vector<16x128xf32>
    %43 = vector.extract_strided_slice %41 {offsets = [16, 0], sizes = [16, 128], strides = [1, 1]} : vector<32x128xf32> to vector<16x128xf32>
    %cst_11 = arith.constant dense<0.000000e+00> : vector<64x128xf32>
    %44 = tpu.matmul %40, %42, %cst_11 {dimension_numbers = #tpu.dot_dimension_numbers<[1], [0], [0], [1], [0, 0, 1, 1], [], []>} : vector<64x16xf32>, vector<16x128xf32>, vector<64x128xf32> -> vector<64x128xf32>
    %cst_12 = arith.constant 0.000000e+00 : f32
    %45 = vector.broadcast %cst_12 : f32 to vector<8x16xf32>
    %cst_13 = arith.constant 0.000000e+00 : f32
    %46 = vector.broadcast %cst_13 : f32 to vector<8x16xf32>
    %cst_14 = arith.constant 0.000000e+00 : f32
    %47 = vector.broadcast %cst_14 : f32 to vector<8x16xf32>
    %48 = vector.extract_strided_slice %44 {offsets = [0, 0], sizes = [8, 128], strides = [1, 1]} : vector<64x128xf32> to vector<8x128xf32>
    %cst_15 = arith.constant dense<0.000000e+00> : vector<8x128xf32>
    %49 = tpu.matmul %45, %43, %cst_15 {dimension_numbers = #tpu.dot_dimension_numbers<[1], [0], [0], [1], [0, 0, 1, 1], [], []>} : vector<8x16xf32>, vector<16x128xf32>, vector<8x128xf32> -> vector<8x128xf32>
    %50 = arith.addf %48, %49 : vector<8x128xf32>
    %51 = vector.extract_strided_slice %50 {offsets = [0, 0], sizes = [8, 64], strides = [1, 1]} : vector<8x128xf32> to vector<8x64xf32>
    %52 = vector.extract_strided_slice %50 {offsets = [0, 64], sizes = [8, 64], strides = [1, 1]} : vector<8x128xf32> to vector<8x64xf32>
    %53 = vector.shape_cast %33 : vector<8x1xi1> to vector<8x1xi1>
    %54 = vector.broadcast %53 : vector<8x1xi1> to vector<8x64xi1>
    %55 = arith.select %54, %51, %52 : vector<8x64xi1>, vector<8x64xf32>
    %56 = math.tanh %55 : vector<8x64xf32>
    %57 = arith.negf %55 : vector<8x64xf32>
    %58 = math.exp %57 : vector<8x64xf32>
    %cst_16 = arith.constant 1.000000e+00 : f32
    %59 = vector.broadcast %cst_16 : f32 to vector<8x64xf32>
    %60 = arith.addf %59, %58 : vector<8x64xf32>
    %61 = arith.divf %59, %60 : vector<8x64xf32>
    %62 = arith.select %39, %56, %61 : vector<8x64xi1>, vector<8x64xf32>
    %63 = vector.extract_strided_slice %62 {offsets = [0, 0], sizes = [8, 16], strides = [1, 1]} : vector<8x64xf32> to vector<8x16xf32>
    %64 = vector.extract_strided_slice %62 {offsets = [0, 16], sizes = [8, 16], strides = [1, 1]} : vector<8x64xf32> to vector<8x16xf32>
    %65 = vector.extract_strided_slice %62 {offsets = [0, 32], sizes = [8, 16], strides = [1, 1]} : vector<8x64xf32> to vector<8x16xf32>
    %66 = vector.extract_strided_slice %62 {offsets = [0, 48], sizes = [8, 16], strides = [1, 1]} : vector<8x64xf32> to vector<8x16xf32>
    %67 = arith.mulf %64, %46 : vector<8x16xf32>
    %68 = arith.mulf %63, %65 : vector<8x16xf32>
    %69 = arith.addf %67, %68 : vector<8x16xf32>
    %70 = math.tanh %69 : vector<8x16xf32>
    %71 = arith.mulf %66, %70 : vector<8x16xf32>
    %72 = arith.addf %47, %71 : vector<8x16xf32>
    %73 = vector.extract_strided_slice %44 {offsets = [8, 0], sizes = [8, 128], strides = [1, 1]} : vector<64x128xf32> to vector<8x128xf32>
    %cst_17 = arith.constant dense<0.000000e+00> : vector<8x128xf32>
    %74 = tpu.matmul %71, %43, %cst_17 {dimension_numbers = #tpu.dot_dimension_numbers<[1], [0], [0], [1], [0, 0, 1, 1], [], []>} : vector<8x16xf32>, vector<16x128xf32>, vector<8x128xf32> -> vector<8x128xf32>
    %75 = arith.addf %73, %74 : vector<8x128xf32>
    %76 = vector.extract_strided_slice %75 {offsets = [0, 0], sizes = [8, 64], strides = [1, 1]} : vector<8x128xf32> to vector<8x64xf32>
    %77 = vector.extract_strided_slice %75 {offsets = [0, 64], sizes = [8, 64], strides = [1, 1]} : vector<8x128xf32> to vector<8x64xf32>
    %78 = vector.shape_cast %33 : vector<8x1xi1> to vector<8x1xi1>
    %79 = vector.broadcast %78 : vector<8x1xi1> to vector<8x64xi1>
    %80 = arith.select %79, %76, %77 : vector<8x64xi1>, vector<8x64xf32>
    %81 = math.tanh %80 : vector<8x64xf32>
    %82 = arith.negf %80 : vector<8x64xf32>
    %83 = math.exp %82 : vector<8x64xf32>
    %cst_18 = arith.constant 1.000000e+00 : f32
    %84 = vector.broadcast %cst_18 : f32 to vector<8x64xf32>
    %85 = arith.addf %84, %83 : vector<8x64xf32>
    %86 = arith.divf %84, %85 : vector<8x64xf32>
    %87 = arith.select %39, %81, %86 : vector<8x64xi1>, vector<8x64xf32>
    %88 = vector.extract_strided_slice %87 {offsets = [0, 0], sizes = [8, 16], strides = [1, 1]} : vector<8x64xf32> to vector<8x16xf32>
    %89 = vector.extract_strided_slice %87 {offsets = [0, 16], sizes = [8, 16], strides = [1, 1]} : vector<8x64xf32> to vector<8x16xf32>
    %90 = vector.extract_strided_slice %87 {offsets = [0, 32], sizes = [8, 16], strides = [1, 1]} : vector<8x64xf32> to vector<8x16xf32>
    %91 = vector.extract_strided_slice %87 {offsets = [0, 48], sizes = [8, 16], strides = [1, 1]} : vector<8x64xf32> to vector<8x16xf32>
    %92 = arith.mulf %89, %69 : vector<8x16xf32>
    %93 = arith.mulf %88, %90 : vector<8x16xf32>
    %94 = arith.addf %92, %93 : vector<8x16xf32>
    %95 = math.tanh %94 : vector<8x16xf32>
    %96 = arith.mulf %91, %95 : vector<8x16xf32>
    %97 = arith.addf %72, %96 : vector<8x16xf32>
    %98 = vector.extract_strided_slice %44 {offsets = [16, 0], sizes = [8, 128], strides = [1, 1]} : vector<64x128xf32> to vector<8x128xf32>
    %cst_19 = arith.constant dense<0.000000e+00> : vector<8x128xf32>
    %99 = tpu.matmul %96, %43, %cst_19 {dimension_numbers = #tpu.dot_dimension_numbers<[1], [0], [0], [1], [0, 0, 1, 1], [], []>} : vector<8x16xf32>, vector<16x128xf32>, vector<8x128xf32> -> vector<8x128xf32>
    %100 = arith.addf %98, %99 : vector<8x128xf32>
    %101 = vector.extract_strided_slice %100 {offsets = [0, 0], sizes = [8, 64], strides = [1, 1]} : vector<8x128xf32> to vector<8x64xf32>
    %102 = vector.extract_strided_slice %100 {offsets = [0, 64], sizes = [8, 64], strides = [1, 1]} : vector<8x128xf32> to vector<8x64xf32>
    %103 = vector.shape_cast %33 : vector<8x1xi1> to vector<8x1xi1>
    %104 = vector.broadcast %103 : vector<8x1xi1> to vector<8x64xi1>
    %105 = arith.select %104, %101, %102 : vector<8x64xi1>, vector<8x64xf32>
    %106 = math.tanh %105 : vector<8x64xf32>
    %107 = arith.negf %105 : vector<8x64xf32>
    %108 = math.exp %107 : vector<8x64xf32>
    %cst_20 = arith.constant 1.000000e+00 : f32
    %109 = vector.broadcast %cst_20 : f32 to vector<8x64xf32>
    %110 = arith.addf %109, %108 : vector<8x64xf32>
    %111 = arith.divf %109, %110 : vector<8x64xf32>
    %112 = arith.select %39, %106, %111 : vector<8x64xi1>, vector<8x64xf32>
    %113 = vector.extract_strided_slice %112 {offsets = [0, 0], sizes = [8, 16], strides = [1, 1]} : vector<8x64xf32> to vector<8x16xf32>
    %114 = vector.extract_strided_slice %112 {offsets = [0, 16], sizes = [8, 16], strides = [1, 1]} : vector<8x64xf32> to vector<8x16xf32>
    %115 = vector.extract_strided_slice %112 {offsets = [0, 32], sizes = [8, 16], strides = [1, 1]} : vector<8x64xf32> to vector<8x16xf32>
    %116 = vector.extract_strided_slice %112 {offsets = [0, 48], sizes = [8, 16], strides = [1, 1]} : vector<8x64xf32> to vector<8x16xf32>
    %117 = arith.mulf %114, %94 : vector<8x16xf32>
    %118 = arith.mulf %113, %115 : vector<8x16xf32>
    %119 = arith.addf %117, %118 : vector<8x16xf32>
    %120 = math.tanh %119 : vector<8x16xf32>
    %121 = arith.mulf %116, %120 : vector<8x16xf32>
    %122 = arith.addf %97, %121 : vector<8x16xf32>
    %123 = vector.extract_strided_slice %44 {offsets = [24, 0], sizes = [8, 128], strides = [1, 1]} : vector<64x128xf32> to vector<8x128xf32>
    %cst_21 = arith.constant dense<0.000000e+00> : vector<8x128xf32>
    %124 = tpu.matmul %121, %43, %cst_21 {dimension_numbers = #tpu.dot_dimension_numbers<[1], [0], [0], [1], [0, 0, 1, 1], [], []>} : vector<8x16xf32>, vector<16x128xf32>, vector<8x128xf32> -> vector<8x128xf32>
    %125 = arith.addf %123, %124 : vector<8x128xf32>
    %126 = vector.extract_strided_slice %125 {offsets = [0, 0], sizes = [8, 64], strides = [1, 1]} : vector<8x128xf32> to vector<8x64xf32>
    %127 = vector.extract_strided_slice %125 {offsets = [0, 64], sizes = [8, 64], strides = [1, 1]} : vector<8x128xf32> to vector<8x64xf32>
    %128 = vector.shape_cast %33 : vector<8x1xi1> to vector<8x1xi1>
    %129 = vector.broadcast %128 : vector<8x1xi1> to vector<8x64xi1>
    %130 = arith.select %129, %126, %127 : vector<8x64xi1>, vector<8x64xf32>
    %131 = math.tanh %130 : vector<8x64xf32>
    %132 = arith.negf %130 : vector<8x64xf32>
    %133 = math.exp %132 : vector<8x64xf32>
    %cst_22 = arith.constant 1.000000e+00 : f32
    %134 = vector.broadcast %cst_22 : f32 to vector<8x64xf32>
    %135 = arith.addf %134, %133 : vector<8x64xf32>
    %136 = arith.divf %134, %135 : vector<8x64xf32>
    %137 = arith.select %39, %131, %136 : vector<8x64xi1>, vector<8x64xf32>
    %138 = vector.extract_strided_slice %137 {offsets = [0, 0], sizes = [8, 16], strides = [1, 1]} : vector<8x64xf32> to vector<8x16xf32>
    %139 = vector.extract_strided_slice %137 {offsets = [0, 16], sizes = [8, 16], strides = [1, 1]} : vector<8x64xf32> to vector<8x16xf32>
    %140 = vector.extract_strided_slice %137 {offsets = [0, 32], sizes = [8, 16], strides = [1, 1]} : vector<8x64xf32> to vector<8x16xf32>
    %141 = vector.extract_strided_slice %137 {offsets = [0, 48], sizes = [8, 16], strides = [1, 1]} : vector<8x64xf32> to vector<8x16xf32>
    %142 = arith.mulf %139, %119 : vector<8x16xf32>
    %143 = arith.mulf %138, %140 : vector<8x16xf32>
    %144 = arith.addf %142, %143 : vector<8x16xf32>
    %145 = math.tanh %144 : vector<8x16xf32>
    %146 = arith.mulf %141, %145 : vector<8x16xf32>
    %147 = arith.addf %122, %146 : vector<8x16xf32>
    %148 = vector.extract_strided_slice %44 {offsets = [32, 0], sizes = [8, 128], strides = [1, 1]} : vector<64x128xf32> to vector<8x128xf32>
    %cst_23 = arith.constant dense<0.000000e+00> : vector<8x128xf32>
    %149 = tpu.matmul %146, %43, %cst_23 {dimension_numbers = #tpu.dot_dimension_numbers<[1], [0], [0], [1], [0, 0, 1, 1], [], []>} : vector<8x16xf32>, vector<16x128xf32>, vector<8x128xf32> -> vector<8x128xf32>
    %150 = arith.addf %148, %149 : vector<8x128xf32>
    %151 = vector.extract_strided_slice %150 {offsets = [0, 0], sizes = [8, 64], strides = [1, 1]} : vector<8x128xf32> to vector<8x64xf32>
    %152 = vector.extract_strided_slice %150 {offsets = [0, 64], sizes = [8, 64], strides = [1, 1]} : vector<8x128xf32> to vector<8x64xf32>
    %153 = vector.shape_cast %33 : vector<8x1xi1> to vector<8x1xi1>
    %154 = vector.broadcast %153 : vector<8x1xi1> to vector<8x64xi1>
    %155 = arith.select %154, %151, %152 : vector<8x64xi1>, vector<8x64xf32>
    %156 = math.tanh %155 : vector<8x64xf32>
    %157 = arith.negf %155 : vector<8x64xf32>
    %158 = math.exp %157 : vector<8x64xf32>
    %cst_24 = arith.constant 1.000000e+00 : f32
    %159 = vector.broadcast %cst_24 : f32 to vector<8x64xf32>
    %160 = arith.addf %159, %158 : vector<8x64xf32>
    %161 = arith.divf %159, %160 : vector<8x64xf32>
    %162 = arith.select %39, %156, %161 : vector<8x64xi1>, vector<8x64xf32>
    %163 = vector.extract_strided_slice %162 {offsets = [0, 0], sizes = [8, 16], strides = [1, 1]} : vector<8x64xf32> to vector<8x16xf32>
    %164 = vector.extract_strided_slice %162 {offsets = [0, 16], sizes = [8, 16], strides = [1, 1]} : vector<8x64xf32> to vector<8x16xf32>
    %165 = vector.extract_strided_slice %162 {offsets = [0, 32], sizes = [8, 16], strides = [1, 1]} : vector<8x64xf32> to vector<8x16xf32>
    %166 = vector.extract_strided_slice %162 {offsets = [0, 48], sizes = [8, 16], strides = [1, 1]} : vector<8x64xf32> to vector<8x16xf32>
    %167 = arith.mulf %164, %144 : vector<8x16xf32>
    %168 = arith.mulf %163, %165 : vector<8x16xf32>
    %169 = arith.addf %167, %168 : vector<8x16xf32>
    %170 = math.tanh %169 : vector<8x16xf32>
    %171 = arith.mulf %166, %170 : vector<8x16xf32>
    %172 = arith.addf %147, %171 : vector<8x16xf32>
    %173 = vector.extract_strided_slice %44 {offsets = [40, 0], sizes = [8, 128], strides = [1, 1]} : vector<64x128xf32> to vector<8x128xf32>
    %cst_25 = arith.constant dense<0.000000e+00> : vector<8x128xf32>
    %174 = tpu.matmul %171, %43, %cst_25 {dimension_numbers = #tpu.dot_dimension_numbers<[1], [0], [0], [1], [0, 0, 1, 1], [], []>} : vector<8x16xf32>, vector<16x128xf32>, vector<8x128xf32> -> vector<8x128xf32>
    %175 = arith.addf %173, %174 : vector<8x128xf32>
    %176 = vector.extract_strided_slice %175 {offsets = [0, 0], sizes = [8, 64], strides = [1, 1]} : vector<8x128xf32> to vector<8x64xf32>
    %177 = vector.extract_strided_slice %175 {offsets = [0, 64], sizes = [8, 64], strides = [1, 1]} : vector<8x128xf32> to vector<8x64xf32>
    %178 = vector.shape_cast %33 : vector<8x1xi1> to vector<8x1xi1>
    %179 = vector.broadcast %178 : vector<8x1xi1> to vector<8x64xi1>
    %180 = arith.select %179, %176, %177 : vector<8x64xi1>, vector<8x64xf32>
    %181 = math.tanh %180 : vector<8x64xf32>
    %182 = arith.negf %180 : vector<8x64xf32>
    %183 = math.exp %182 : vector<8x64xf32>
    %cst_26 = arith.constant 1.000000e+00 : f32
    %184 = vector.broadcast %cst_26 : f32 to vector<8x64xf32>
    %185 = arith.addf %184, %183 : vector<8x64xf32>
    %186 = arith.divf %184, %185 : vector<8x64xf32>
    %187 = arith.select %39, %181, %186 : vector<8x64xi1>, vector<8x64xf32>
    %188 = vector.extract_strided_slice %187 {offsets = [0, 0], sizes = [8, 16], strides = [1, 1]} : vector<8x64xf32> to vector<8x16xf32>
    %189 = vector.extract_strided_slice %187 {offsets = [0, 16], sizes = [8, 16], strides = [1, 1]} : vector<8x64xf32> to vector<8x16xf32>
    %190 = vector.extract_strided_slice %187 {offsets = [0, 32], sizes = [8, 16], strides = [1, 1]} : vector<8x64xf32> to vector<8x16xf32>
    %191 = vector.extract_strided_slice %187 {offsets = [0, 48], sizes = [8, 16], strides = [1, 1]} : vector<8x64xf32> to vector<8x16xf32>
    %192 = arith.mulf %189, %169 : vector<8x16xf32>
    %193 = arith.mulf %188, %190 : vector<8x16xf32>
    %194 = arith.addf %192, %193 : vector<8x16xf32>
    %195 = math.tanh %194 : vector<8x16xf32>
    %196 = arith.mulf %191, %195 : vector<8x16xf32>
    %197 = arith.addf %172, %196 : vector<8x16xf32>
    %198 = vector.extract_strided_slice %44 {offsets = [48, 0], sizes = [8, 128], strides = [1, 1]} : vector<64x128xf32> to vector<8x128xf32>
    %cst_27 = arith.constant dense<0.000000e+00> : vector<8x128xf32>
    %199 = tpu.matmul %196, %43, %cst_27 {dimension_numbers = #tpu.dot_dimension_numbers<[1], [0], [0], [1], [0, 0, 1, 1], [], []>} : vector<8x16xf32>, vector<16x128xf32>, vector<8x128xf32> -> vector<8x128xf32>
    %200 = arith.addf %198, %199 : vector<8x128xf32>
    %201 = vector.extract_strided_slice %200 {offsets = [0, 0], sizes = [8, 64], strides = [1, 1]} : vector<8x128xf32> to vector<8x64xf32>
    %202 = vector.extract_strided_slice %200 {offsets = [0, 64], sizes = [8, 64], strides = [1, 1]} : vector<8x128xf32> to vector<8x64xf32>
    %203 = vector.shape_cast %33 : vector<8x1xi1> to vector<8x1xi1>
    %204 = vector.broadcast %203 : vector<8x1xi1> to vector<8x64xi1>
    %205 = arith.select %204, %201, %202 : vector<8x64xi1>, vector<8x64xf32>
    %206 = math.tanh %205 : vector<8x64xf32>
    %207 = arith.negf %205 : vector<8x64xf32>
    %208 = math.exp %207 : vector<8x64xf32>
    %cst_28 = arith.constant 1.000000e+00 : f32
    %209 = vector.broadcast %cst_28 : f32 to vector<8x64xf32>
    %210 = arith.addf %209, %208 : vector<8x64xf32>
    %211 = arith.divf %209, %210 : vector<8x64xf32>
    %212 = arith.select %39, %206, %211 : vector<8x64xi1>, vector<8x64xf32>
    %213 = vector.extract_strided_slice %212 {offsets = [0, 0], sizes = [8, 16], strides = [1, 1]} : vector<8x64xf32> to vector<8x16xf32>
    %214 = vector.extract_strided_slice %212 {offsets = [0, 16], sizes = [8, 16], strides = [1, 1]} : vector<8x64xf32> to vector<8x16xf32>
    %215 = vector.extract_strided_slice %212 {offsets = [0, 32], sizes = [8, 16], strides = [1, 1]} : vector<8x64xf32> to vector<8x16xf32>
    %216 = vector.extract_strided_slice %212 {offsets = [0, 48], sizes = [8, 16], strides = [1, 1]} : vector<8x64xf32> to vector<8x16xf32>
    %217 = arith.mulf %214, %194 : vector<8x16xf32>
    %218 = arith.mulf %213, %215 : vector<8x16xf32>
    %219 = arith.addf %217, %218 : vector<8x16xf32>
    %220 = math.tanh %219 : vector<8x16xf32>
    %221 = arith.mulf %216, %220 : vector<8x16xf32>
    %222 = arith.addf %197, %221 : vector<8x16xf32>
    %223 = vector.extract_strided_slice %44 {offsets = [56, 0], sizes = [8, 128], strides = [1, 1]} : vector<64x128xf32> to vector<8x128xf32>
    %cst_29 = arith.constant dense<0.000000e+00> : vector<8x128xf32>
    %224 = tpu.matmul %221, %43, %cst_29 {dimension_numbers = #tpu.dot_dimension_numbers<[1], [0], [0], [1], [0, 0, 1, 1], [], []>} : vector<8x16xf32>, vector<16x128xf32>, vector<8x128xf32> -> vector<8x128xf32>
    %225 = arith.addf %223, %224 : vector<8x128xf32>
    %226 = vector.extract_strided_slice %225 {offsets = [0, 0], sizes = [8, 64], strides = [1, 1]} : vector<8x128xf32> to vector<8x64xf32>
    %227 = vector.extract_strided_slice %225 {offsets = [0, 64], sizes = [8, 64], strides = [1, 1]} : vector<8x128xf32> to vector<8x64xf32>
    %228 = vector.shape_cast %33 : vector<8x1xi1> to vector<8x1xi1>
    %229 = vector.broadcast %228 : vector<8x1xi1> to vector<8x64xi1>
    %230 = arith.select %229, %226, %227 : vector<8x64xi1>, vector<8x64xf32>
    %231 = math.tanh %230 : vector<8x64xf32>
    %232 = arith.negf %230 : vector<8x64xf32>
    %233 = math.exp %232 : vector<8x64xf32>
    %cst_30 = arith.constant 1.000000e+00 : f32
    %234 = vector.broadcast %cst_30 : f32 to vector<8x64xf32>
    %235 = arith.addf %234, %233 : vector<8x64xf32>
    %236 = arith.divf %234, %235 : vector<8x64xf32>
    %237 = arith.select %39, %231, %236 : vector<8x64xi1>, vector<8x64xf32>
    %238 = vector.extract_strided_slice %237 {offsets = [0, 0], sizes = [8, 16], strides = [1, 1]} : vector<8x64xf32> to vector<8x16xf32>
    %239 = vector.extract_strided_slice %237 {offsets = [0, 16], sizes = [8, 16], strides = [1, 1]} : vector<8x64xf32> to vector<8x16xf32>
    %240 = vector.extract_strided_slice %237 {offsets = [0, 32], sizes = [8, 16], strides = [1, 1]} : vector<8x64xf32> to vector<8x16xf32>
    %241 = vector.extract_strided_slice %237 {offsets = [0, 48], sizes = [8, 16], strides = [1, 1]} : vector<8x64xf32> to vector<8x16xf32>
    %242 = arith.mulf %239, %219 : vector<8x16xf32>
    %243 = arith.mulf %238, %240 : vector<8x16xf32>
    %244 = arith.addf %242, %243 : vector<8x16xf32>
    %245 = math.tanh %244 : vector<8x16xf32>
    %246 = arith.mulf %241, %245 : vector<8x16xf32>
    %247 = arith.addf %222, %246 : vector<8x16xf32>
    %248 = vector.extract_strided_slice %247 {offsets = [0, 0], sizes = [4, 16], strides = [1, 1]} : vector<8x16xf32> to vector<4x16xf32>
    %249 = vector.extract_strided_slice %247 {offsets = [4, 0], sizes = [4, 16], strides = [1, 1]} : vector<8x16xf32> to vector<4x16xf32>
    %250 = tpu.concatenate %248, %249 in 1 : vector<4x16xf32>, vector<4x16xf32> -> vector<4x32xf32>
    %cst_31 = arith.constant 1.250000e-01 : f32
    %251 = vector.broadcast %cst_31 : f32 to vector<4x32xf32>
    %252 = arith.mulf %250, %251 : vector<4x32xf32>
    %c0_32 = arith.constant 0 : index
    %c0_33 = arith.constant 0 : index
    %253 = vector.load %arg5[%c0_32, %c0_33] : memref<33x128xf32, #tpu.memory_space<vmem>>, vector<33x128xf32>
    %254 = vector.extract_strided_slice %253 {offsets = [0, 0], sizes = [32, 32], strides = [1, 1]} : vector<33x128xf32> to vector<32x32xf32>
    %255 = vector.extract_strided_slice %253 {offsets = [0, 32], sizes = [32, 32], strides = [1, 1]} : vector<33x128xf32> to vector<32x32xf32>
    %256 = vector.extract_strided_slice %253 {offsets = [0, 64], sizes = [32, 32], strides = [1, 1]} : vector<33x128xf32> to vector<32x32xf32>
    %257 = vector.extract_strided_slice %253 {offsets = [0, 96], sizes = [32, 1], strides = [1, 1]} : vector<33x128xf32> to vector<32x1xf32>
    %258 = vector.extract_strided_slice %253 {offsets = [32, 0], sizes = [1, 32], strides = [1, 1]} : vector<33x128xf32> to vector<1x32xf32>
    %259 = vector.extract_strided_slice %253 {offsets = [32, 32], sizes = [1, 32], strides = [1, 1]} : vector<33x128xf32> to vector<1x32xf32>
    %260 = vector.extract_strided_slice %253 {offsets = [32, 64], sizes = [1, 1], strides = [1, 1]} : vector<33x128xf32> to vector<1x1xf32>
    %cst_34 = arith.constant dense<0.000000e+00> : vector<4x32xf32>
    %261 = tpu.matmul %30, %254, %cst_34 {dimension_numbers = #tpu.dot_dimension_numbers<[1], [0], [0], [1], [0, 0, 1, 1], [], []>} : vector<4x32xf32>, vector<32x32xf32>, vector<4x32xf32> -> vector<4x32xf32>
    %cst_35 = arith.constant dense<0.000000e+00> : vector<4x32xf32>
    %262 = tpu.matmul %252, %255, %cst_35 {dimension_numbers = #tpu.dot_dimension_numbers<[1], [0], [0], [1], [0, 0, 1, 1], [], []>} : vector<4x32xf32>, vector<32x32xf32>, vector<4x32xf32> -> vector<4x32xf32>
    %263 = arith.addf %261, %262 : vector<4x32xf32>
    %264 = vector.broadcast %258 : vector<1x32xf32> to vector<4x32xf32>
    %265 = arith.addf %263, %264 : vector<4x32xf32>
    %266 = arith.negf %265 : vector<4x32xf32>
    %267 = math.exp %266 : vector<4x32xf32>
    %cst_36 = arith.constant 1.000000e+00 : f32
    %268 = vector.broadcast %cst_36 : f32 to vector<4x32xf32>
    %269 = arith.addf %268, %267 : vector<4x32xf32>
    %270 = arith.divf %268, %269 : vector<4x32xf32>
    %271 = arith.mulf %270, %30 : vector<4x32xf32>
    %cst_37 = arith.constant 1.000000e+00 : f32
    %272 = vector.broadcast %cst_37 : f32 to vector<4x32xf32>
    %273 = arith.subf %272, %270 : vector<4x32xf32>
    %274 = arith.mulf %273, %252 : vector<4x32xf32>
    %275 = arith.addf %271, %274 : vector<4x32xf32>
    %cst_38 = arith.constant dense<0.000000e+00> : vector<4x32xf32>
    %276 = tpu.matmul %275, %256, %cst_38 {dimension_numbers = #tpu.dot_dimension_numbers<[1], [0], [0], [1], [0, 0, 1, 1], [], []>} : vector<4x32xf32>, vector<32x32xf32>, vector<4x32xf32> -> vector<4x32xf32>
    %277 = vector.broadcast %259 : vector<1x32xf32> to vector<4x32xf32>
    %278 = arith.addf %276, %277 : vector<4x32xf32>
    %279 = math.tanh %278 : vector<4x32xf32>
    %cst_39 = arith.constant dense<0.000000e+00> : vector<4x1xf32>
    %280 = tpu.matmul %279, %257, %cst_39 {dimension_numbers = #tpu.dot_dimension_numbers<[1], [0], [0], [1], [0, 0, 1, 1], [], []>} : vector<4x32xf32>, vector<32x1xf32>, vector<4x1xf32> -> vector<4x1xf32>
    %281 = vector.broadcast %260 : vector<1x1xf32> to vector<4x1xf32>
    %282 = arith.addf %280, %281 : vector<4x1xf32>
    %283 = arith.negf %282 : vector<4x1xf32>
    %284 = math.exp %283 : vector<4x1xf32>
    %cst_40 = arith.constant 1.000000e+00 : f32
    %285 = vector.broadcast %cst_40 : f32 to vector<4x1xf32>
    %286 = arith.addf %285, %284 : vector<4x1xf32>
    %287 = arith.divf %285, %286 : vector<4x1xf32>
    %c0_41 = arith.constant 0 : index
    %c0_42 = arith.constant 0 : index
    %288 = vector.load %arg6[%c0_41, %c0_42] : memref<4x32xf32, #tpu.memory_space<vmem>>, vector<4x32xf32>
    tpu.vector_store %arg6[%c0_41, %c0_42], %275 {strides = array<i32>} : memref<4x32xf32, #tpu.memory_space<vmem>>, vector<4x32xf32>,
    %c0_43 = arith.constant 0 : index
    %c0_44 = arith.constant 0 : index
    %289 = vector.load %arg7[%c0_43, %c0_44] : memref<4x1xf32, #tpu.memory_space<vmem>>, vector<4x1xf32>
    tpu.vector_store %arg7[%c0_43, %c0_44], %287 {strides = array<i32>} : memref<4x1xf32, #tpu.memory_space<vmem>>, vector<4x1xf32>,
    return
  }
}

</mosaic_0001>

<llo_original>
// kernel: rast_eval_forward.1
$region0: #{rast_eval_forward.1}
  #allocation0 [shape = 'u32[]', space=smem, size = 0x4, offset = 0x4, fixed_abs, tag = 'smem constant byte address 0x4 - core index']
  #allocation1 [shape = 'u32[144,128]{1,0:T(1,128)}', space=vmem, size = 0x12000, scoped, tag = 'internal scratch']
  %s0 = inlined_call_operand.vmem [shape: f32[32,32], index: 0, kind: input, shape index: {}]
  %s1 = inlined_call_operand.vmem [shape: f32[32,32], index: 1, kind: input, shape index: {}]
  %s2 = inlined_call_operand.vmem [shape: f32[64,16], index: 2, kind: input, shape index: {}]
  %s3 = inlined_call_operand.vmem [shape: s32[4], index: 3, kind: input, shape index: {}]
  %s4 = inlined_call_operand.vmem [shape: f32[32,128], index: 4, kind: input, shape index: {}]
  %s5 = inlined_call_operand.vmem [shape: f32[33,128], index: 5, kind: input, shape index: {}]
  %s6 = inlined_call_operand.hbm [shape: f32[4,32], index: 6, kind: output, shape index: {0}]
  %s7 = inlined_call_operand.vmem [shape: f32[4,1], index: 7, kind: output, shape index: {1}]
  %8 = xla_tuple %s6, %s7
  %s9 = sld [smem:[#allocation0]]
  $region46: #{rast_eval_forward.1} parent=0
    _
  %s11 = ssub.s32 1, %s9
  %s12 = scalar_select 0, %s11, %s9
  $region1: #{rast_eval_forward.1} parent=0
    #allocation2 [shape = 'u8[512]{0}', space=smem, size = 0x200, scoped, tag = 'input window, operand 3, single buffered']
    #allocation3 [shape = 's32[1]{0}', space=sflag, size = 0x4, scoped, tag = 'scoped memory for rast_eval_forward.1']
    #allocation4 [shape = 's32[1]{0}', space=sflag, size = 0x4, scoped, tag = 'scoped memory for rast_eval_forward.1']
    #allocation5 [shape = 'u8[2048]{0}', space=vmem, size = 0x800, scoped, tag = 'output window, operand 0, single buffered']
    %13 = vsyncpa [#allocation4], 0
    %14 = vsyncpa [#allocation3], 0
    // Predicated region
    $region2: #{rast_eval_forward.1} parent=1 // pred_check
      _
    $region3: #{rast_eval_forward.1} parent=1 // pred_check_branch
      %16 = sbr.rel (0) target = $region5
    $region4: #{rast_eval_forward.1} parent=1 // pred_region
      _
    $region5: #{rast_eval_forward.1} parent=1 // pred_fallthru
      _
    // Predicated region
    $region6: #{rast_eval_forward.1} parent=1 // pred_check
      _
    $region7: #{rast_eval_forward.1} parent=1 // pred_check_branch
      %18 = sbr.rel (0) target = $region9
    $region8: #{rast_eval_forward.1} parent=1 // pred_region
      _
    $region9: #{rast_eval_forward.1} parent=1 // pred_fallthru
      _
    // Predicated region
    $region10: #{rast_eval_forward.1} parent=1 // pred_check
      _
    $region11: #{rast_eval_forward.1} parent=1 // pred_check_branch
      %20 = sbr.rel (0) target = $region13
    $region12: #{rast_eval_forward.1} parent=1 // pred_region
      _
    $region13: #{rast_eval_forward.1} parent=1 // pred_fallthru
      _
    // Predicated region
    $region14: #{rast_eval_forward.1} parent=1 // pred_check
      _
    $region15: #{rast_eval_forward.1} parent=1 // pred_check_branch
      %22 = sbr.rel (0) target = $region17
    $region16: #{rast_eval_forward.1} parent=1 // pred_region
      %s24 = ssub.s32 16, 16
      %25 = vsyncadd [#allocation4], %s24
      %s27 = sshll.u32 %s3, 4
      %s28 = int_to_ptr.vmem [resolvable:$true] %s27
      %30 = dma.vmem_to_smem %s28, 16, [#allocation2], [#allocation4]
    $region17: #{rast_eval_forward.1} parent=1 // pred_fallthru
      _
    // Predicated region
    $region18: #{rast_eval_forward.1} parent=1 // pred_check
      _
    $region19: #{rast_eval_forward.1} parent=1 // pred_check_branch
      %32 = sbr.rel (0) target = $region21
    $region20: #{rast_eval_forward.1} parent=1 // pred_region
      _
    $region21: #{rast_eval_forward.1} parent=1 // pred_fallthru
      _
    // Predicated region
    $region22: #{rast_eval_forward.1} parent=1 // pred_check
      _
    $region23: #{rast_eval_forward.1} parent=1 // pred_check_branch
      %34 = sbr.rel (0) target = $region25
    $region24: #{rast_eval_forward.1} parent=1 // pred_region
      _
    $region25: #{rast_eval_forward.1} parent=1 // pred_fallthru
      _
    // Predicated region
    $region26: #{rast_eval_forward.1} parent=1 // pred_check
      _
    $region27: #{rast_eval_forward.1} parent=1 // pred_check_branch
      %36 = sbr.rel (0) target = $region29
    $region28: #{rast_eval_forward.1} parent=1 // pred_region
      %37 = dma.done [#allocation4], 16
    $region29: #{rast_eval_forward.1} parent=1 // pred_fallthru
      _
    %38 = sfence
    %v39 = vld [vmem:[%s0] sm:$0xff]
    %v40 = vld [vmem:[%s0 + $0x8] sm:$0xff]
    %v41 = vld [vmem:[%s0 + $0x10] sm:$0xff]
    %v42 = vld [vmem:[%s0 + $0x18] sm:$0xff]
    %v43 = vld [vmem:[%s1] sm:$0xff]
    %v44 = vld [vmem:[%s1 + $0x8] sm:$0xff]
    %v45 = vld [vmem:[%s1 + $0x10] sm:$0xff]
    %v46 = vld [vmem:[%s1 + $0x18] sm:$0xff]
    %v47 = vlaneseq
    %v48 = vand.u32 %v47, 127
    %s49 = sld [smem:[#allocation2]]
    %v50 = vstv %s49
    %vm51 = vcmp.eq.s32.totalorder %v48, %v50
    %v52 = vsel %vm51, 1, 0
    %v53 = vcvt.s32.f32 %v52
    %s54 = sld [smem:[#allocation2 + $0x1]]
    %v55 = vstv %s54
    %vm56 = vcmp.eq.s32.totalorder %v48, %v55
    %v57 = vsel %vm56, 1, 0
    %v58 = vcvt.s32.f32 %v57
    %s59 = sld [smem:[#allocation2 + $0x2]]
    %v60 = vstv %s59
    %vm61 = vcmp.eq.s32.totalorder %v48, %v60
    %v62 = vsel %vm61, 1, 0
    %v63 = vcvt.s32.f32 %v62
    %s64 = sld [smem:[#allocation2 + $0x3]]
    %v65 = vstv %s64
    %vm66 = vcmp.eq.s32.totalorder %v48, %v65
    %v67 = vsel %vm66, 1, 0
    %v68 = vcvt.s32.f32 %v67
    %vm69 = vcmask 1040384
    %v70 = vsel %vm69, %v53, %v58
    %vm71 = vcmask 1041408
    %v72 = vsel %vm71, %v70, %v63
    %vm73 = vcmask 1042432
    %v74 = vsel %vm73, %v72, %v68
    %vm75 = vcmask 261120
    %v77 = vsel %vm75, %v74, 0
    %79 = vmatprep.subr.mxu0 0.0
    %80 = vmatpush1.msra.mxu0 0.0
    %81 = vmatprep.subr.mxu0 0.0
    %82 = vmatpush1.msra.mxu0 0.0
    %83 = vmatprep.subr.mxu0 0.0
    %84 = vmatpush1.msra.mxu0 0.0
    %85 = vmatprep.subr.mxu0 0.0
    %86 = vmatpush1.msra.mxu0 0.0
    %87 = vmatprep.subr.mxu0 0.0
    %88 = vmatpush1.msra.mxu0 0.0
    %89 = vmatprep.subr.mxu0 0.0
    %90 = vmatpush1.msra.mxu0 0.0
    %91 = vmatprep.subr.mxu0 0.0
    %92 = vmatpush1.msra.mxu0 0.0
    %93 = vmatprep.subr.mxu0 0.0
    %94 = vmatpush1.msra.mxu0 0.0
    %95 = vmatprep.subr.mxu0 0.0
    %96 = vmatpush1.msra.mxu0 0.0
    %97 = vmatprep.subr.mxu0 0.0
    %98 = vmatpush1.msra.mxu0 0.0
    %99 = vmatprep.subr.mxu0 0.0
    %100 = vmatpush1.msra.mxu0 0.0
    %101 = vmatprep.subr.mxu0 0.0
    %102 = vmatpush1.msra.mxu0 0.0
    %103 = vmatprep.subr.mxu0 0.0
    %104 = vmatpush1.msra.mxu0 %v42
    %105 = vmatprep.subr.mxu0 0.0
    %106 = vmatpush1.msra.mxu0 %v41
    %107 = vmatprep.subr.mxu0 0.0
    %108 = vmatpush1.msra.mxu0 %v40
    %109 = vmatprep.subr.mxu0 0.0
    %110 = vmatpush1.msra.mxu0 %v39
    %111 = vmatprep.subr.mxu0 0.0
    %112 = vmatpush2.msra.mxu0 0.0
    %113 = vmatprep.subr.mxu0 0.0
    %114 = vmatpush2.msra.mxu0 0.0
    %115 = vmatprep.subr.mxu0 0.0
    %116 = vmatpush2.msra.mxu0 0.0
    %117 = vmatprep.subr.mxu0 0.0
    %118 = vmatpush2.msra.mxu0 0.0
    %119 = vmatprep.subr.mxu0 0.0
    %120 = vmatpush2.msra.mxu0 0.0
    %121 = vmatprep.subr.mxu0 0.0
    %122 = vmatpush2.msra.mxu0 0.0
    %123 = vmatprep.subr.mxu0 0.0
    %124 = vmatpush2.msra.mxu0 0.0
    %125 = vmatprep.subr.mxu0 0.0
    %126 = vmatpush2.msra.mxu0 0.0
    %127 = vmatprep.subr.mxu0 0.0
    %128 = vmatpush2.msra.mxu0 0.0
    %129 = vmatprep.subr.mxu0 0.0
    %130 = vmatpush2.msra.mxu0 0.0
    %131 = vmatprep.subr.mxu0 0.0
    %132 = vmatpush2.msra.mxu0 0.0
    %133 = vmatprep.subr.mxu0 0.0
    %134 = vmatpush2.msra.mxu0 0.0
    %135 = vmatprep.subr.mxu0 0.0
    %136 = vmatpush2.msra.mxu0 0.0
    %137 = vmatprep.subr.mxu0 0.0
    %138 = vmatpush2.msra.mxu0 0.0
    %139 = vmatprep.subr.mxu0 0.0
    %140 = vmatpush2.msra.mxu0 0.0
    %141 = vmatprep.subr.mxu0 0.0
    %142 = vmatpush2.msra.mxu0 0.0
    %143 = vmatprep.mubr.f32.mxu0 0.0
    %144 = vmatmul.mubr.f32.gmra.mxu0 %v77
    %v145 = vpop.f32.mrf.mxu0
    %v146 = vadd.f32 0.0, %v145
    %v147 = vpop.f32.mrf.mxu0
    %148 = vdwg.mxu0
    %v149 = vadd.f32 %v74, %v146
    %v151 = vsel %vm75, %v146, 0
    %153 = vmatprep.subr.mxu0 0.0
    %154 = vmatpush1.msra.mxu0 0.0
    %155 = vmatprep.subr.mxu0 0.0
    %156 = vmatpush1.msra.mxu0 0.0
    %157 = vmatprep.subr.mxu0 0.0
    %158 = vmatpush1.msra.mxu0 0.0
    %159 = vmatprep.subr.mxu0 0.0
    %160 = vmatpush1.msra.mxu0 0.0
    %161 = vmatprep.subr.mxu0 0.0
    %162 = vmatpush1.msra.mxu0 0.0
    %163 = vmatprep.subr.mxu0 0.0
    %164 = vmatpush1.msra.mxu0 0.0
    %165 = vmatprep.subr.mxu0 0.0
    %166 = vmatpush1.msra.mxu0 0.0
    %167 = vmatprep.subr.mxu0 0.0
    %168 = vmatpush1.msra.mxu0 0.0
    %169 = vmatprep.subr.mxu0 0.0
    %170 = vmatpush1.msra.mxu0 0.0
    %171 = vmatprep.subr.mxu0 0.0
    %172 = vmatpush1.msra.mxu0 0.0
    %173 = vmatprep.subr.mxu0 0.0
    %174 = vmatpush1.msra.mxu0 0.0
    %175 = vmatprep.subr.mxu0 0.0
    %176 = vmatpush1.msra.mxu0 0.0
    %177 = vmatprep.subr.mxu0 0.0
    %178 = vmatpush1.msra.mxu0 %v42
    %179 = vmatprep.subr.mxu0 0.0
    %180 = vmatpush1.msra.mxu0 %v41
    %181 = vmatprep.subr.mxu0 0.0
    %182 = vmatpush1.msra.mxu0 %v40
    %183 = vmatprep.subr.mxu0 0.0
    %184 = vmatpush1.msra.mxu0 %v39
    %185 = vmatprep.subr.mxu0 0.0
    %186 = vmatpush2.msra.mxu0 0.0
    %187 = vmatprep.subr.mxu0 0.0
    %188 = vmatpush2.msra.mxu0 0.0
    %189 = vmatprep.subr.mxu0 0.0
    %190 = vmatpush2.msra.mxu0 0.0
    %191 = vmatprep.subr.mxu0 0.0
    %192 = vmatpush2.msra.mxu0 0.0
    %193 = vmatprep.subr.mxu0 0.0
    %194 = vmatpush2.msra.mxu0 0.0
    %195 = vmatprep.subr.mxu0 0.0
    %196 = vmatpush2.msra.mxu0 0.0
    %197 = vmatprep.subr.mxu0 0.0
    %198 = vmatpush2.msra.mxu0 0.0
    %199 = vmatprep.subr.mxu0 0.0
    %200 = vmatpush2.msra.mxu0 0.0
    %201 = vmatprep.subr.mxu0 0.0
    %202 = vmatpush2.msra.mxu0 0.0
    %203 = vmatprep.subr.mxu0 0.0
    %204 = vmatpush2.msra.mxu0 0.0
    %205 = vmatprep.subr.mxu0 0.0
    %206 = vmatpush2.msra.mxu0 0.0
    %207 = vmatprep.subr.mxu0 0.0
    %208 = vmatpush2.msra.mxu0 0.0
    %209 = vmatprep.subr.mxu0 0.0
    %210 = vmatpush2.msra.mxu0 0.0
    %211 = vmatprep.subr.mxu0 0.0
    %212 = vmatpush2.msra.mxu0 0.0
    %213 = vmatprep.subr.mxu0 0.0
    %214 = vmatpush2.msra.mxu0 0.0
    %215 = vmatprep.subr.mxu0 0.0
    %216 = vmatpush2.msra.mxu0 0.0
    %217 = vmatprep.mubr.f32.mxu0 0.0
    %218 = vmatmul.mubr.f32.gmra.mxu0 %v151
    %v219 = vpop.f32.mrf.mxu0
    %v220 = vadd.f32 0.0, %v219
    %v221 = vpop.f32.mrf.mxu0
    %222 = vdwg.mxu0
    %v223 = vadd.f32 %v149, %v220
    %v225 = vsel %vm75, %v223, 0
    %227 = vmatprep.subr.mxu0 0.0
    %228 = vmatpush1.msra.mxu0 0.0
    %229 = vmatprep.subr.mxu0 0.0
    %230 = vmatpush1.msra.mxu0 0.0
    %231 = vmatprep.subr.mxu0 0.0
    %232 = vmatpush1.msra.mxu0 0.0
    %233 = vmatprep.subr.mxu0 0.0
    %234 = vmatpush1.msra.mxu0 0.0
    %235 = vmatprep.subr.mxu0 0.0
    %236 = vmatpush1.msra.mxu0 0.0
    %237 = vmatprep.subr.mxu0 0.0
    %238 = vmatpush1.msra.mxu0 0.0
    %239 = vmatprep.subr.mxu0 0.0
    %240 = vmatpush1.msra.mxu0 0.0
    %241 = vmatprep.subr.mxu0 0.0
    %242 = vmatpush1.msra.mxu0 0.0
    %243 = vmatprep.subr.mxu0 0.0
    %244 = vmatpush1.msra.mxu0 0.0
    %245 = vmatprep.subr.mxu0 0.0
    %246 = vmatpush1.msra.mxu0 0.0
    %247 = vmatprep.subr.mxu0 0.0
    %248 = vmatpush1.msra.mxu0 0.0
    %249 = vmatprep.subr.mxu0 0.0
    %250 = vmatpush1.msra.mxu0 0.0
    %251 = vmatprep.subr.mxu0 0.0
    %252 = vmatpush1.msra.mxu0 %v46
    %253 = vmatprep.subr.mxu0 0.0
    %254 = vmatpush1.msra.mxu0 %v45
    %255 = vmatprep.subr.mxu0 0.0
    %256 = vmatpush1.msra.mxu0 %v44
    %257 = vmatprep.subr.mxu0 0.0
    %258 = vmatpush1.msra.mxu0 %v43
    %259 = vmatprep.subr.mxu0 0.0
    %260 = vmatpush2.msra.mxu0 0.0
    %261 = vmatprep.subr.mxu0 0.0
    %262 = vmatpush2.msra.mxu0 0.0
    %263 = vmatprep.subr.mxu0 0.0
    %264 = vmatpush2.msra.mxu0 0.0
    %265 = vmatprep.subr.mxu0 0.0
    %266 = vmatpush2.msra.mxu0 0.0
    %267 = vmatprep.subr.mxu0 0.0
    %268 = vmatpush2.msra.mxu0 0.0
    %269 = vmatprep.subr.mxu0 0.0
    %270 = vmatpush2.msra.mxu0 0.0
    %271 = vmatprep.subr.mxu0 0.0
    %272 = vmatpush2.msra.mxu0 0.0
    %273 = vmatprep.subr.mxu0 0.0
    %274 = vmatpush2.msra.mxu0 0.0
    %275 = vmatprep.subr.mxu0 0.0
    %276 = vmatpush2.msra.mxu0 0.0
    %277 = vmatprep.subr.mxu0 0.0
    %278 = vmatpush2.msra.mxu0 0.0
    %279 = vmatprep.subr.mxu0 0.0
    %280 = vmatpush2.msra.mxu0 0.0
    %281 = vmatprep.subr.mxu0 0.0
    %282 = vmatpush2.msra.mxu0 0.0
    %283 = vmatprep.subr.mxu0 0.0
    %284 = vmatpush2.msra.mxu0 0.0
    %285 = vmatprep.subr.mxu0 0.0
    %286 = vmatpush2.msra.mxu0 0.0
    %287 = vmatprep.subr.mxu0 0.0
    %288 = vmatpush2.msra.mxu0 0.0
    %289 = vmatprep.subr.mxu0 0.0
    %290 = vmatpush2.msra.mxu0 0.0
    %291 = vmatprep.mubr.f32.mxu0 0.0
    %292 = vmatmul.mubr.f32.gmra.mxu0 %v225
    %v293 = vpop.f32.mrf.mxu0
    %v294 = vadd.f32 0.0, %v293
    %v295 = vpop.f32.mrf.mxu0
    %296 = vdwg.mxu0
    %v297 = vmul.f32 %v294, 0.33333334
    %v298 = vlaneseq
    %v299 = vshrl.u32 %v298, 7
    %vm300 = vcmp.lt.s32.totalorder %v299, 4
    %vm301 = vcmp.ge.s32.totalorder %v48, 32
    %vm302 = vcmp.lt.s32.totalorder %v48, 48
    %vm303 = vmand %vm301, %vm302
    %v304 = vld [vmem:[%s2] sm:$0xff]
    %v305 = vld [vmem:[%s2 + $0x8] sm:$0xff]
    %v306 = vld [vmem:[%s2 + $0x10] sm:$0xff]
    %v307 = vld [vmem:[%s2 + $0x18] sm:$0xff]
    %v308 = vld [vmem:[%s2 + $0x20] sm:$0xff]
    %v309 = vld [vmem:[%s2 + $0x28] sm:$0xff]
    %v310 = vld [vmem:[%s2 + $0x30] sm:$0xff]
    %v311 = vld [vmem:[%s2 + $0x38] sm:$0xff]
    %v312 = vld [vmem:[%s4] sm:$0xff]
    %v313 = vld [vmem:[%s4 + $0x8] sm:$0xff]
    %v314 = vld [vmem:[%s4 + $0x10] sm:$0xff]
    %v315 = vld [vmem:[%s4 + $0x18] sm:$0xff]
    %vm316 = vcmask 130048
    %v318 = vsel %vm316, %v304, 0
    %v321 = vsel %vm316, %v305, 0
    %v324 = vsel %vm316, %v306, 0
    %v327 = vsel %vm316, %v307, 0
    %v330 = vsel %vm316, %v308, 0
    %v333 = vsel %vm316, %v309, 0
    %v336 = vsel %vm316, %v310, 0
    %v339 = vsel %vm316, %v311, 0
    %341 = vmatprep.subr.mxu0 0.0
    %342 = vmatpush1.msra.mxu0 0.0
    %343 = vmatprep.subr.mxu0 0.0
    %344 = vmatpush1.msra.mxu0 0.0
    %345 = vmatprep.subr.mxu0 0.0
    %346 = vmatpush1.msra.mxu0 0.0
    %347 = vmatprep.subr.mxu0 0.0
    %348 = vmatpush1.msra.mxu0 0.0
    %349 = vmatprep.subr.mxu0 0.0
    %350 = vmatpush1.msra.mxu0 0.0
    %351 = vmatprep.subr.mxu0 0.0
    %352 = vmatpush1.msra.mxu0 0.0
    %353 = vmatprep.subr.mxu0 0.0
    %354 = vmatpush1.msra.mxu0 0.0
    %355 = vmatprep.subr.mxu0 0.0
    %356 = vmatpush1.msra.mxu0 0.0
    %357 = vmatprep.subr.mxu0 0.0
    %358 = vmatpush1.msra.mxu0 0.0
    %359 = vmatprep.subr.mxu0 0.0
    %360 = vmatpush1.msra.mxu0 0.0
    %361 = vmatprep.subr.mxu0 0.0
    %362 = vmatpush1.msra.mxu0 0.0
    %363 = vmatprep.subr.mxu0 0.0
    %364 = vmatpush1.msra.mxu0 0.0
    %365 = vmatprep.subr.mxu0 0.0
    %366 = vmatpush1.msra.mxu0 0.0
    %367 = vmatprep.subr.mxu0 0.0
    %368 = vmatpush1.msra.mxu0 0.0
    %369 = vmatprep.subr.mxu0 0.0
    %370 = vmatpush1.msra.mxu0 %v313
    %371 = vmatprep.subr.mxu0 0.0
    %372 = vmatpush1.msra.mxu0 %v312
    %373 = vmatprep.subr.mxu0 0.0
    %374 = vmatpush2.msra.mxu0 0.0
    %375 = vmatprep.subr.mxu0 0.0
    %376 = vmatpush2.msra.mxu0 0.0
    %377 = vmatprep.subr.mxu0 0.0
    %378 = vmatpush2.msra.mxu0 0.0
    %379 = vmatprep.subr.mxu0 0.0
    %380 = vmatpush2.msra.mxu0 0.0
    %381 = vmatprep.subr.mxu0 0.0
    %382 = vmatpush2.msra.mxu0 0.0
    %383 = vmatprep.subr.mxu0 0.0
    %384 = vmatpush2.msra.mxu0 0.0
    %385 = vmatprep.subr.mxu0 0.0
    %386 = vmatpush2.msra.mxu0 0.0
    %387 = vmatprep.subr.mxu0 0.0
    %388 = vmatpush2.msra.mxu0 0.0
    %389 = vmatprep.subr.mxu0 0.0
    %390 = vmatpush2.msra.mxu0 0.0
    %391 = vmatprep.subr.mxu0 0.0
    %392 = vmatpush2.msra.mxu0 0.0
    %393 = vmatprep.subr.mxu0 0.0
    %394 = vmatpush2.msra.mxu0 0.0
    %395 = vmatprep.subr.mxu0 0.0
    %396 = vmatpush2.msra.mxu0 0.0
    %397 = vmatprep.subr.mxu0 0.0
    %398 = vmatpush2.msra.mxu0 0.0
    %399 = vmatprep.subr.mxu0 0.0
    %400 = vmatpush2.msra.mxu0 0.0
    %401 = vmatprep.subr.mxu0 0.0
    %402 = vmatpush2.msra.mxu0 0.0
    %403 = vmatprep.subr.mxu0 0.0
    %404 = vmatpush2.msra.mxu0 0.0
    %405 = vmatprep.mubr.f32.mxu0 0.0
    %406 = vmatmul.mubr.f32.gmra.mxu0 %v318
    %v407 = vpop.f32.mrf.mxu0
    %v408 = vadd.f32 0.0, %v407
    %v409 = vpop.f32.mrf.mxu0
    %410 = vmatprep.mubr.f32.mxu0 0.0
    %411 = vmatmul.mubr.f32.gmra.mxu0 %v321
    %v412 = vpop.f32.mrf.mxu0
    %v413 = vadd.f32 0.0, %v412
    %v414 = vpop.f32.mrf.mxu0
    %415 = vmatprep.mubr.f32.mxu0 0.0
    %416 = vmatmul.mubr.f32.gmra.mxu0 %v324
    %v417 = vpop.f32.mrf.mxu0
    %v418 = vadd.f32 0.0, %v417
    %v419 = vpop.f32.mrf.mxu0
    %420 = vmatprep.mubr.f32.mxu0 0.0
    %421 = vmatmul.mubr.f32.gmra.mxu0 %v327
    %v422 = vpop.f32.mrf.mxu0
    %v423 = vadd.f32 0.0, %v422
    %v424 = vpop.f32.mrf.mxu0
    %425 = vmatprep.mubr.f32.mxu0 0.0
    %426 = vmatmul.mubr.f32.gmra.mxu0 %v330
    %v427 = vpop.f32.mrf.mxu0
    %v428 = vadd.f32 0.0, %v427
    %v429 = vpop.f32.mrf.mxu0
    %430 = vmatprep.mubr.f32.mxu0 0.0
    %431 = vmatmul.mubr.f32.gmra.mxu0 %v333
    %v432 = vpop.f32.mrf.mxu0
    %v433 = vadd.f32 0.0, %v432
    %v434 = vpop.f32.mrf.mxu0
    %435 = vmatprep.mubr.f32.mxu0 0.0
    %436 = vmatmul.mubr.f32.gmra.mxu0 %v336
    %v437 = vpop.f32.mrf.mxu0
    %v438 = vadd.f32 0.0, %v437
    %v439 = vpop.f32.mrf.mxu0
    %440 = vmatprep.mubr.f32.mxu0 0.0
    %441 = vmatmul.mubr.f32.gmra.mxu0 %v339
    %v442 = vpop.f32.mrf.mxu0
    %v443 = vadd.f32 0.0, %v442
    %v444 = vpop.f32.mrf.mxu0
    %445 = vdwg.mxu0
    %v447 = vsel %vm316, 0.0, 0
    %449 = vmatprep.subr.mxu0 0.0
    %450 = vmatpush1.msra.mxu0 0.0
    %451 = vmatprep.subr.mxu0 0.0
    %452 = vmatpush1.msra.mxu0 0.0
    %453 = vmatprep.subr.mxu0 0.0
    %454 = vmatpush1.msra.mxu0 0.0
    %455 = vmatprep.subr.mxu0 0.0
    %456 = vmatpush1.msra.mxu0 0.0
    %457 = vmatprep.subr.mxu0 0.0
    %458 = vmatpush1.msra.mxu0 0.0
    %459 = vmatprep.subr.mxu0 0.0
    %460 = vmatpush1.msra.mxu0 0.0
    %461 = vmatprep.subr.mxu0 0.0
    %462 = vmatpush1.msra.mxu0 0.0
    %463 = vmatprep.subr.mxu0 0.0
    %464 = vmatpush1.msra.mxu0 0.0
    %465 = vmatprep.subr.mxu0 0.0
    %466 = vmatpush1.msra.mxu0 0.0
    %467 = vmatprep.subr.mxu0 0.0
    %468 = vmatpush1.msra.mxu0 0.0
    %469 = vmatprep.subr.mxu0 0.0
    %470 = vmatpush1.msra.mxu0 0.0
    %471 = vmatprep.subr.mxu0 0.0
    %472 = vmatpush1.msra.mxu0 0.0
    %473 = vmatprep.subr.mxu0 0.0
    %474 = vmatpush1.msra.mxu0 0.0
    %475 = vmatprep.subr.mxu0 0.0
    %476 = vmatpush1.msra.mxu0 0.0
    %477 = vmatprep.subr.mxu0 0.0
    %478 = vmatpush1.msra.mxu0 %v315
    %479 = vmatprep.subr.mxu0 0.0
    %480 = vmatpush1.msra.mxu0 %v314
    %481 = vmatprep.subr.mxu0 0.0
    %482 = vmatpush2.msra.mxu0 0.0
    %483 = vmatprep.subr.mxu0 0.0
    %484 = vmatpush2.msra.mxu0 0.0
    %485 = vmatprep.subr.mxu0 0.0
    %486 = vmatpush2.msra.mxu0 0.0
    %487 = vmatprep.subr.mxu0 0.0
    %488 = vmatpush2.msra.mxu0 0.0
    %489 = vmatprep.subr.mxu0 0.0
    %490 = vmatpush2.msra.mxu0 0.0
    %491 = vmatprep.subr.mxu0 0.0
    %492 = vmatpush2.msra.mxu0 0.0
    %493 = vmatprep.subr.mxu0 0.0
    %494 = vmatpush2.msra.mxu0 0.0
    %495 = vmatprep.subr.mxu0 0.0
    %496 = vmatpush2.msra.mxu0 0.0
    %497 = vmatprep.subr.mxu0 0.0
    %498 = vmatpush2.msra.mxu0 0.0
    %499 = vmatprep.subr.mxu0 0.0
    %500 = vmatpush2.msra.mxu0 0.0
    %501 = vmatprep.subr.mxu0 0.0
    %502 = vmatpush2.msra.mxu0 0.0
    %503 = vmatprep.subr.mxu0 0.0
    %504 = vmatpush2.msra.mxu0 0.0
    %505 = vmatprep.subr.mxu0 0.0
    %506 = vmatpush2.msra.mxu0 0.0
    %507 = vmatprep.subr.mxu0 0.0
    %508 = vmatpush2.msra.mxu0 0.0
    %509 = vmatprep.subr.mxu0 0.0
    %510 = vmatpush2.msra.mxu0 0.0
    %511 = vmatprep.subr.mxu0 0.0
    %512 = vmatpush2.msra.mxu0 0.0
    %513 = vmatprep.mubr.f32.mxu0 0.0
    %514 = vmatmul.mubr.f32.gmra.mxu0 %v447
    %v515 = vpop.f32.mrf.mxu0
    %v516 = vadd.f32 0.0, %v515
    %v517 = vpop.f32.mrf.mxu0
    %518 = vdwg.mxu0
    %v519 = vadd.f32 %v408, %v516
    %v520 = vsel %vm300, 1, 0
    %vm521 = vcmp.eq.s32.totalorder %v520, 1
    %523 = vrot.lane.b32.xlu0 %v519, 64
    %v524 = vpop.permute.xlu0 %523
    %v526 = vsel %vm521, %v519, %v524
    %v527 = vtanh.pop %v526
    %v528 = vxor.u32 %v526, 2147483648
    %v529 = vmul.f32 %v528, 1.442695
    %v530 = vpow.pop %v529
    %v531 = vadd.f32 %v530, 1.0
    %v532 = vrcp.pop %v531
    %v533 = vmul.f32 1.0, %v532
    %v534 = vsel %vm303, %v527, %v533
    %v535 = vmul.f32 %v534, 0.0
    %537 = vrot.lane.b32.xlu0 %v534, 96
    %v538 = vpop.permute.xlu0 %537
    %v540 = vmul.f32 %v534, %v538
    %542 = vrot.lane.b32.xlu0 %v540, 16
    %v543 = vpop.permute.xlu0 %542
    %v545 = vadd.f32 %v535, %v543
    %v546 = vtanh.pop %v545
    %548 = vrot.lane.b32.xlu0 %v546, 32
    %v549 = vpop.permute.xlu0 %548
    %v551 = vmul.f32 %v534, %v549
    %v552 = vadd.f32 %v551, 0.0
    %554 = vrot.lane.b32.xlu0 %v551, 80
    %v555 = vpop.permute.xlu0 %554
    %v556 = vsel %vm316, %v555, 0
    %558 = vmatprep.subr.mxu0 0.0
    %559 = vmatpush1.msra.mxu0 0.0
    %560 = vmatprep.subr.mxu0 0.0
    %561 = vmatpush1.msra.mxu0 0.0
    %562 = vmatprep.subr.mxu0 0.0
    %563 = vmatpush1.msra.mxu0 0.0
    %564 = vmatprep.subr.mxu0 0.0
    %565 = vmatpush1.msra.mxu0 0.0
    %566 = vmatprep.subr.mxu0 0.0
    %567 = vmatpush1.msra.mxu0 0.0
    %568 = vmatprep.subr.mxu0 0.0
    %569 = vmatpush1.msra.mxu0 0.0
    %570 = vmatprep.subr.mxu0 0.0
    %571 = vmatpush1.msra.mxu0 0.0
    %572 = vmatprep.subr.mxu0 0.0
    %573 = vmatpush1.msra.mxu0 0.0
    %574 = vmatprep.subr.mxu0 0.0
    %575 = vmatpush1.msra.mxu0 0.0
    %576 = vmatprep.subr.mxu0 0.0
    %577 = vmatpush1.msra.mxu0 0.0
    %578 = vmatprep.subr.mxu0 0.0
    %579 = vmatpush1.msra.mxu0 0.0
    %580 = vmatprep.subr.mxu0 0.0
    %581 = vmatpush1.msra.mxu0 0.0
    %582 = vmatprep.subr.mxu0 0.0
    %583 = vmatpush1.msra.mxu0 0.0
    %584 = vmatprep.subr.mxu0 0.0
    %585 = vmatpush1.msra.mxu0 0.0
    %586 = vmatprep.subr.mxu0 0.0
    %587 = vmatpush1.msra.mxu0 %v315
    %588 = vmatprep.subr.mxu0 0.0
    %589 = vmatpush1.msra.mxu0 %v314
    %590 = vmatprep.subr.mxu0 0.0
    %591 = vmatpush2.msra.mxu0 0.0
    %592 = vmatprep.subr.mxu0 0.0
    %593 = vmatpush2.msra.mxu0 0.0
    %594 = vmatprep.subr.mxu0 0.0
    %595 = vmatpush2.msra.mxu0 0.0
    %596 = vmatprep.subr.mxu0 0.0
    %597 = vmatpush2.msra.mxu0 0.0
    %598 = vmatprep.subr.mxu0 0.0
    %599 = vmatpush2.msra.mxu0 0.0
    %600 = vmatprep.subr.mxu0 0.0
    %601 = vmatpush2.msra.mxu0 0.0
    %602 = vmatprep.subr.mxu0 0.0
    %603 = vmatpush2.msra.mxu0 0.0
    %604 = vmatprep.subr.mxu0 0.0
    %605 = vmatpush2.msra.mxu0 0.0
    %606 = vmatprep.subr.mxu0 0.0
    %607 = vmatpush2.msra.mxu0 0.0
    %608 = vmatprep.subr.mxu0 0.0
    %609 = vmatpush2.msra.mxu0 0.0
    %610 = vmatprep.subr.mxu0 0.0
    %611 = vmatpush2.msra.mxu0 0.0
    %612 = vmatprep.subr.mxu0 0.0
    %613 = vmatpush2.msra.mxu0 0.0
    %614 = vmatprep.subr.mxu0 0.0
    %615 = vmatpush2.msra.mxu0 0.0
    %616 = vmatprep.subr.mxu0 0.0
    %617 = vmatpush2.msra.mxu0 0.0
    %618 = vmatprep.subr.mxu0 0.0
    %619 = vmatpush2.msra.mxu0 0.0
    %620 = vmatprep.subr.mxu0 0.0
    %621 = vmatpush2.msra.mxu0 0.0
    %622 = vmatprep.mubr.f32.mxu0 0.0
    %623 = vmatmul.mubr.f32.gmra.mxu0 %v556
    %v624 = vpop.f32.mrf.mxu0
    %v625 = vadd.f32 0.0, %v624
    %v626 = vpop.f32.mrf.mxu0
    %627 = vdwg.mxu0
    %v628 = vadd.f32 %v413, %v625
    %630 = vrot.lane.b32.xlu0 %v628, 64
    %v631 = vpop.permute.xlu0 %630
    %v633 = vsel %vm521, %v628, %v631
    %v634 = vtanh.pop %v633
    %v635 = vxor.u32 %v633, 2147483648
    %v636 = vmul.f32 %v635, 1.442695
    %v637 = vpow.pop %v636
    %v638 = vadd.f32 %v637, 1.0
    %v639 = vrcp.pop %v638
    %v640 = vmul.f32 1.0, %v639
    %v641 = vsel %vm303, %v634, %v640
    %v642 = vmul.f32 %v641, %v545
    %644 = vrot.lane.b32.xlu0 %v641, 96
    %v645 = vpop.permute.xlu0 %644
    %v647 = vmul.f32 %v641, %v645
    %649 = vrot.lane.b32.xlu0 %v647, 16
    %v650 = vpop.permute.xlu0 %649
    %v652 = vadd.f32 %v642, %v650
    %v653 = vtanh.pop %v652
    %655 = vrot.lane.b32.xlu0 %v653, 32
    %v656 = vpop.permute.xlu0 %655
    %v658 = vmul.f32 %v641, %v656
    %v659 = vadd.f32 %v552, %v658
    %661 = vrot.lane.b32.xlu0 %v658, 80
    %v662 = vpop.permute.xlu0 %661
    %v663 = vsel %vm316, %v662, 0
    %665 = vmatprep.subr.mxu0 0.0
    %666 = vmatpush1.msra.mxu0 0.0
    %667 = vmatprep.subr.mxu0 0.0
    %668 = vmatpush1.msra.mxu0 0.0
    %669 = vmatprep.subr.mxu0 0.0
    %670 = vmatpush1.msra.mxu0 0.0
    %671 = vmatprep.subr.mxu0 0.0
    %672 = vmatpush1.msra.mxu0 0.0
    %673 = vmatprep.subr.mxu0 0.0
    %674 = vmatpush1.msra.mxu0 0.0
    %675 = vmatprep.subr.mxu0 0.0
    %676 = vmatpush1.msra.mxu0 0.0
    %677 = vmatprep.subr.mxu0 0.0
    %678 = vmatpush1.msra.mxu0 0.0
    %679 = vmatprep.subr.mxu0 0.0
    %680 = vmatpush1.msra.mxu0 0.0
    %681 = vmatprep.subr.mxu0 0.0
    %682 = vmatpush1.msra.mxu0 0.0
    %683 = vmatprep.subr.mxu0 0.0
    %684 = vmatpush1.msra.mxu0 0.0
    %685 = vmatprep.subr.mxu0 0.0
    %686 = vmatpush1.msra.mxu0 0.0
    %687 = vmatprep.subr.mxu0 0.0
    %688 = vmatpush1.msra.mxu0 0.0
    %689 = vmatprep.subr.mxu0 0.0
    %690 = vmatpush1.msra.mxu0 0.0
    %691 = vmatprep.subr.mxu0 0.0
    %692 = vmatpush1.msra.mxu0 0.0
    %693 = vmatprep.subr.mxu0 0.0
    %694 = vmatpush1.msra.mxu0 %v315
    %695 = vmatprep.subr.mxu0 0.0
    %696 = vmatpush1.msra.mxu0 %v314
    %697 = vmatprep.subr.mxu0 0.0
    %698 = vmatpush2.msra.mxu0 0.0
    %699 = vmatprep.subr.mxu0 0.0
    %700 = vmatpush2.msra.mxu0 0.0
    %701 = vmatprep.subr.mxu0 0.0
    %702 = vmatpush2.msra.mxu0 0.0
    %703 = vmatprep.subr.mxu0 0.0
    %704 = vmatpush2.msra.mxu0 0.0
    %705 = vmatprep.subr.mxu0 0.0
    %706 = vmatpush2.msra.mxu0 0.0
    %707 = vmatprep.subr.mxu0 0.0
    %708 = vmatpush2.msra.mxu0 0.0
    %709 = vmatprep.subr.mxu0 0.0
    %710 = vmatpush2.msra.mxu0 0.0
    %711 = vmatprep.subr.mxu0 0.0
    %712 = vmatpush2.msra.mxu0 0.0
    %713 = vmatprep.subr.mxu0 0.0
    %714 = vmatpush2.msra.mxu0 0.0
    %715 = vmatprep.subr.mxu0 0.0
    %716 = vmatpush2.msra.mxu0 0.0
    %717 = vmatprep.subr.mxu0 0.0
    %718 = vmatpush2.msra.mxu0 0.0
    %719 = vmatprep.subr.mxu0 0.0
    %720 = vmatpush2.msra.mxu0 0.0
    %721 = vmatprep.subr.mxu0 0.0
    %722 = vmatpush2.msra.mxu0 0.0
    %723 = vmatprep.subr.mxu0 0.0
    %724 = vmatpush2.msra.mxu0 0.0
    %725 = vmatprep.subr.mxu0 0.0
    %726 = vmatpush2.msra.mxu0 0.0
    %727 = vmatprep.subr.mxu0 0.0
    %728 = vmatpush2.msra.mxu0 0.0
    %729 = vmatprep.mubr.f32.mxu0 0.0
    %730 = vmatmul.mubr.f32.gmra.mxu0 %v663
    %v731 = vpop.f32.mrf.mxu0
    %v732 = vadd.f32 0.0, %v731
    %v733 = vpop.f32.mrf.mxu0
    %734 = vdwg.mxu0
    %v735 = vadd.f32 %v418, %v732
    %737 = vrot.lane.b32.xlu0 %v735, 64
    %v738 = vpop.permute.xlu0 %737
    %v740 = vsel %vm521, %v735, %v738
    %v741 = vtanh.pop %v740
    %v742 = vxor.u32 %v740, 2147483648
    %v743 = vmul.f32 %v742, 1.442695
    %v744 = vpow.pop %v743
    %v745 = vadd.f32 %v744, 1.0
    %v746 = vrcp.pop %v745
    %v747 = vmul.f32 1.0, %v746
    %v748 = vsel %vm303, %v741, %v747
    %v749 = vmul.f32 %v748, %v652
    %751 = vrot.lane.b32.xlu0 %v748, 96
    %v752 = vpop.permute.xlu0 %751
    %v754 = vmul.f32 %v748, %v752
    %756 = vrot.lane.b32.xlu0 %v754, 16
    %v757 = vpop.permute.xlu0 %756
    %v759 = vadd.f32 %v749, %v757
    %v760 = vtanh.pop %v759
    %762 = vrot.lane.b32.xlu0 %v760, 32
    %v763 = vpop.permute.xlu0 %762
    %v765 = vmul.f32 %v748, %v763
    %v766 = vadd.f32 %v659, %v765
    %768 = vrot.lane.b32.xlu0 %v765, 80
    %v769 = vpop.permute.xlu0 %768
    %v770 = vsel %vm316, %v769, 0
    %772 = vmatprep.subr.mxu0 0.0
    %773 = vmatpush1.msra.mxu0 0.0
    %774 = vmatprep.subr.mxu0 0.0
    %775 = vmatpush1.msra.mxu0 0.0
    %776 = vmatprep.subr.mxu0 0.0
    %777 = vmatpush1.msra.mxu0 0.0
    %778 = vmatprep.subr.mxu0 0.0
    %779 = vmatpush1.msra.mxu0 0.0
    %780 = vmatprep.subr.mxu0 0.0
    %781 = vmatpush1.msra.mxu0 0.0
    %782 = vmatprep.subr.mxu0 0.0
    %783 = vmatpush1.msra.mxu0 0.0
    %784 = vmatprep.subr.mxu0 0.0
    %785 = vmatpush1.msra.mxu0 0.0
    %786 = vmatprep.subr.mxu0 0.0
    %787 = vmatpush1.msra.mxu0 0.0
    %788 = vmatprep.subr.mxu0 0.0
    %789 = vmatpush1.msra.mxu0 0.0
    %790 = vmatprep.subr.mxu0 0.0
    %791 = vmatpush1.msra.mxu0 0.0
    %792 = vmatprep.subr.mxu0 0.0
    %793 = vmatpush1.msra.mxu0 0.0
    %794 = vmatprep.subr.mxu0 0.0
    %795 = vmatpush1.msra.mxu0 0.0
    %796 = vmatprep.subr.mxu0 0.0
    %797 = vmatpush1.msra.mxu0 0.0
    %798 = vmatprep.subr.mxu0 0.0
    %799 = vmatpush1.msra.mxu0 0.0
    %800 = vmatprep.subr.mxu0 0.0
    %801 = vmatpush1.msra.mxu0 %v315
    %802 = vmatprep.subr.mxu0 0.0
    %803 = vmatpush1.msra.mxu0 %v314
    %804 = vmatprep.subr.mxu0 0.0
    %805 = vmatpush2.msra.mxu0 0.0
    %806 = vmatprep.subr.mxu0 0.0
    %807 = vmatpush2.msra.mxu0 0.0
    %808 = vmatprep.subr.mxu0 0.0
    %809 = vmatpush2.msra.mxu0 0.0
    %810 = vmatprep.subr.mxu0 0.0
    %811 = vmatpush2.msra.mxu0 0.0
    %812 = vmatprep.subr.mxu0 0.0
    %813 = vmatpush2.msra.mxu0 0.0
    %814 = vmatprep.subr.mxu0 0.0
    %815 = vmatpush2.msra.mxu0 0.0
    %816 = vmatprep.subr.mxu0 0.0
    %817 = vmatpush2.msra.mxu0 0.0
    %818 = vmatprep.subr.mxu0 0.0
    %819 = vmatpush2.msra.mxu0 0.0
    %820 = vmatprep.subr.mxu0 0.0
    %821 = vmatpush2.msra.mxu0 0.0
    %822 = vmatprep.subr.mxu0 0.0
    %823 = vmatpush2.msra.mxu0 0.0
    %824 = vmatprep.subr.mxu0 0.0
    %825 = vmatpush2.msra.mxu0 0.0
    %826 = vmatprep.subr.mxu0 0.0
    %827 = vmatpush2.msra.mxu0 0.0
    %828 = vmatprep.subr.mxu0 0.0
    %829 = vmatpush2.msra.mxu0 0.0
    %830 = vmatprep.subr.mxu0 0.0
    %831 = vmatpush2.msra.mxu0 0.0
    %832 = vmatprep.subr.mxu0 0.0
    %833 = vmatpush2.msra.mxu0 0.0
    %834 = vmatprep.subr.mxu0 0.0
    %835 = vmatpush2.msra.mxu0 0.0
    %836 = vmatprep.mubr.f32.mxu0 0.0
    %837 = vmatmul.mubr.f32.gmra.mxu0 %v770
    %v838 = vpop.f32.mrf.mxu0
    %v839 = vadd.f32 0.0, %v838
    %v840 = vpop.f32.mrf.mxu0
    %841 = vdwg.mxu0
    %v842 = vadd.f32 %v423, %v839
    %844 = vrot.lane.b32.xlu0 %v842, 64
    %v845 = vpop.permute.xlu0 %844
    %v847 = vsel %vm521, %v842, %v845
    %v848 = vtanh.pop %v847
    %v849 = vxor.u32 %v847, 2147483648
    %v850 = vmul.f32 %v849, 1.442695
    %v851 = vpow.pop %v850
    %v852 = vadd.f32 %v851, 1.0
    %v853 = vrcp.pop %v852
    %v854 = vmul.f32 1.0, %v853
    %v855 = vsel %vm303, %v848, %v854
    %v856 = vmul.f32 %v855, %v759
    %858 = vrot.lane.b32.xlu0 %v855, 96
    %v859 = vpop.permute.xlu0 %858
    %v861 = vmul.f32 %v855, %v859
    %863 = vrot.lane.b32.xlu0 %v861, 16
    %v864 = vpop.permute.xlu0 %863
    %v866 = vadd.f32 %v856, %v864
    %v867 = vtanh.pop %v866
    %869 = vrot.lane.b32.xlu0 %v867, 32
    %v870 = vpop.permute.xlu0 %869
    %v872 = vmul.f32 %v855, %v870
    %v873 = vadd.f32 %v766, %v872
    %875 = vrot.lane.b32.xlu0 %v872, 80
    %v876 = vpop.permute.xlu0 %875
    %v877 = vsel %vm316, %v876, 0
    %879 = vmatprep.subr.mxu0 0.0
    %880 = vmatpush1.msra.mxu0 0.0
    %881 = vmatprep.subr.mxu0 0.0
    %882 = vmatpush1.msra.mxu0 0.0
    %883 = vmatprep.subr.mxu0 0.0
    %884 = vmatpush1.msra.mxu0 0.0
    %885 = vmatprep.subr.mxu0 0.0
    %886 = vmatpush1.msra.mxu0 0.0
    %887 = vmatprep.subr.mxu0 0.0
    %888 = vmatpush1.msra.mxu0 0.0
    %889 = vmatprep.subr.mxu0 0.0
    %890 = vmatpush1.msra.mxu0 0.0
    %891 = vmatprep.subr.mxu0 0.0
    %892 = vmatpush1.msra.mxu0 0.0
    %893 = vmatprep.subr.mxu0 0.0
    %894 = vmatpush1.msra.mxu0 0.0
    %895 = vmatprep.subr.mxu0 0.0
    %896 = vmatpush1.msra.mxu0 0.0
    %897 = vmatprep.subr.mxu0 0.0
    %898 = vmatpush1.msra.mxu0 0.0
    %899 = vmatprep.subr.mxu0 0.0
    %900 = vmatpush1.msra.mxu0 0.0
    %901 = vmatprep.subr.mxu0 0.0
    %902 = vmatpush1.msra.mxu0 0.0
    %903 = vmatprep.subr.mxu0 0.0
    %904 = vmatpush1.msra.mxu0 0.0
    %905 = vmatprep.subr.mxu0 0.0
    %906 = vmatpush1.msra.mxu0 0.0
    %907 = vmatprep.subr.mxu0 0.0
    %908 = vmatpush1.msra.mxu0 %v315
    %909 = vmatprep.subr.mxu0 0.0
    %910 = vmatpush1.msra.mxu0 %v314
    %911 = vmatprep.subr.mxu0 0.0
    %912 = vmatpush2.msra.mxu0 0.0
    %913 = vmatprep.subr.mxu0 0.0
    %914 = vmatpush2.msra.mxu0 0.0
    %915 = vmatprep.subr.mxu0 0.0
    %916 = vmatpush2.msra.mxu0 0.0
    %917 = vmatprep.subr.mxu0 0.0
    %918 = vmatpush2.msra.mxu0 0.0
    %919 = vmatprep.subr.mxu0 0.0
    %920 = vmatpush2.msra.mxu0 0.0
    %921 = vmatprep.subr.mxu0 0.0
    %922 = vmatpush2.msra.mxu0 0.0
    %923 = vmatprep.subr.mxu0 0.0
    %924 = vmatpush2.msra.mxu0 0.0
    %925 = vmatprep.subr.mxu0 0.0
    %926 = vmatpush2.msra.mxu0 0.0
    %927 = vmatprep.subr.mxu0 0.0
    %928 = vmatpush2.msra.mxu0 0.0
    %929 = vmatprep.subr.mxu0 0.0
    %930 = vmatpush2.msra.mxu0 0.0
    %931 = vmatprep.subr.mxu0 0.0
    %932 = vmatpush2.msra.mxu0 0.0
    %933 = vmatprep.subr.mxu0 0.0
    %934 = vmatpush2.msra.mxu0 0.0
    %935 = vmatprep.subr.mxu0 0.0
    %936 = vmatpush2.msra.mxu0 0.0
    %937 = vmatprep.subr.mxu0 0.0
    %938 = vmatpush2.msra.mxu0 0.0
    %939 = vmatprep.subr.mxu0 0.0
    %940 = vmatpush2.msra.mxu0 0.0
    %941 = vmatprep.subr.mxu0 0.0
    %942 = vmatpush2.msra.mxu0 0.0
    %943 = vmatprep.mubr.f32.mxu0 0.0
    %944 = vmatmul.mubr.f32.gmra.mxu0 %v877
    %v945 = vpop.f32.mrf.mxu0
    %v946 = vadd.f32 0.0, %v945
    %v947 = vpop.f32.mrf.mxu0
    %948 = vdwg.mxu0
    %v949 = vadd.f32 %v428, %v946
    %951 = vrot.lane.b32.xlu0 %v949, 64
    %v952 = vpop.permute.xlu0 %951
    %v954 = vsel %vm521, %v949, %v952
    %v955 = vtanh.pop %v954
    %v956 = vxor.u32 %v954, 2147483648
    %v957 = vmul.f32 %v956, 1.442695
    %v958 = vpow.pop %v957
    %v959 = vadd.f32 %v958, 1.0
    %v960 = vrcp.pop %v959
    %v961 = vmul.f32 1.0, %v960
    %v962 = vsel %vm303, %v955, %v961
    %v963 = vmul.f32 %v962, %v866
    %965 = vrot.lane.b32.xlu0 %v962, 96
    %v966 = vpop.permute.xlu0 %965
    %v968 = vmul.f32 %v962, %v966
    %970 = vrot.lane.b32.xlu0 %v968, 16
    %v971 = vpop.permute.xlu0 %970
    %v973 = vadd.f32 %v963, %v971
    %v974 = vtanh.pop %v973
    %976 = vrot.lane.b32.xlu0 %v974, 32
    %v977 = vpop.permute.xlu0 %976
    %v979 = vmul.f32 %v962, %v977
    %v980 = vadd.f32 %v873, %v979
    %982 = vrot.lane.b32.xlu0 %v979, 80
    %v983 = vpop.permute.xlu0 %982
    %v984 = vsel %vm316, %v983, 0
    %986 = vmatprep.subr.mxu0 0.0
    %987 = vmatpush1.msra.mxu0 0.0
    %988 = vmatprep.subr.mxu0 0.0
    %989 = vmatpush1.msra.mxu0 0.0
    %990 = vmatprep.subr.mxu0 0.0
    %991 = vmatpush1.msra.mxu0 0.0
    %992 = vmatprep.subr.mxu0 0.0
    %993 = vmatpush1.msra.mxu0 0.0
    %994 = vmatprep.subr.mxu0 0.0
    %995 = vmatpush1.msra.mxu0 0.0
    %996 = vmatprep.subr.mxu0 0.0
    %997 = vmatpush1.msra.mxu0 0.0
    %998 = vmatprep.subr.mxu0 0.0
    %999 = vmatpush1.msra.mxu0 0.0
    %1000 = vmatprep.subr.mxu0 0.0
    %1001 = vmatpush1.msra.mxu0 0.0
    %1002 = vmatprep.subr.mxu0 0.0
    %1003 = vmatpush1.msra.mxu0 0.0
    %1004 = vmatprep.subr.mxu0 0.0
    %1005 = vmatpush1.msra.mxu0 0.0
    %1006 = vmatprep.subr.mxu0 0.0
    %1007 = vmatpush1.msra.mxu0 0.0
    %1008 = vmatprep.subr.mxu0 0.0
    %1009 = vmatpush1.msra.mxu0 0.0
    %1010 = vmatprep.subr.mxu0 0.0
    %1011 = vmatpush1.msra.mxu0 0.0
    %1012 = vmatprep.subr.mxu0 0.0
    %1013 = vmatpush1.msra.mxu0 0.0
    %1014 = vmatprep.subr.mxu0 0.0
    %1015 = vmatpush1.msra.mxu0 %v315
    %1016 = vmatprep.subr.mxu0 0.0
    %1017 = vmatpush1.msra.mxu0 %v314
    %1018 = vmatprep.subr.mxu0 0.0
    %1019 = vmatpush2.msra.mxu0 0.0
    %1020 = vmatprep.subr.mxu0 0.0
    %1021 = vmatpush2.msra.mxu0 0.0
    %1022 = vmatprep.subr.mxu0 0.0
    %1023 = vmatpush2.msra.mxu0 0.0
    %1024 = vmatprep.subr.mxu0 0.0
    %1025 = vmatpush2.msra.mxu0 0.0
    %1026 = vmatprep.subr.mxu0 0.0
    %1027 = vmatpush2.msra.mxu0 0.0
    %1028 = vmatprep.subr.mxu0 0.0
    %1029 = vmatpush2.msra.mxu0 0.0
    %1030 = vmatprep.subr.mxu0 0.0
    %1031 = vmatpush2.msra.mxu0 0.0
    %1032 = vmatprep.subr.mxu0 0.0
    %1033 = vmatpush2.msra.mxu0 0.0
    %1034 = vmatprep.subr.mxu0 0.0
    %1035 = vmatpush2.msra.mxu0 0.0
    %1036 = vmatprep.subr.mxu0 0.0
    %1037 = vmatpush2.msra.mxu0 0.0
    %1038 = vmatprep.subr.mxu0 0.0
    %1039 = vmatpush2.msra.mxu0 0.0
    %1040 = vmatprep.subr.mxu0 0.0
    %1041 = vmatpush2.msra.mxu0 0.0
    %1042 = vmatprep.subr.mxu0 0.0
    %1043 = vmatpush2.msra.mxu0 0.0
    %1044 = vmatprep.subr.mxu0 0.0
    %1045 = vmatpush2.msra.mxu0 0.0
    %1046 = vmatprep.subr.mxu0 0.0
    %1047 = vmatpush2.msra.mxu0 0.0
    %1048 = vmatprep.subr.mxu0 0.0
    %1049 = vmatpush2.msra.mxu0 0.0
    %1050 = vmatprep.mubr.f32.mxu0 0.0
    %1051 = vmatmul.mubr.f32.gmra.mxu0 %v984
    %v1052 = vpop.f32.mrf.mxu0
    %v1053 = vadd.f32 0.0, %v1052
    %v1054 = vpop.f32.mrf.mxu0
    %1055 = vdwg.mxu0
    %v1056 = vadd.f32 %v433, %v1053
    %1058 = vrot.lane.b32.xlu0 %v1056, 64
    %v1059 = vpop.permute.xlu0 %1058
    %v1061 = vsel %vm521, %v1056, %v1059
    %v1062 = vtanh.pop %v1061
    %v1063 = vxor.u32 %v1061, 2147483648
    %v1064 = vmul.f32 %v1063, 1.442695
    %v1065 = vpow.pop %v1064
    %v1066 = vadd.f32 %v1065, 1.0
    %v1067 = vrcp.pop %v1066
    %v1068 = vmul.f32 1.0, %v1067
    %v1069 = vsel %vm303, %v1062, %v1068
    %v1070 = vmul.f32 %v1069, %v973
    %1072 = vrot.lane.b32.xlu0 %v1069, 96
    %v1073 = vpop.permute.xlu0 %1072
    %v1075 = vmul.f32 %v1069, %v1073
    %1077 = vrot.lane.b32.xlu0 %v1075, 16
    %v1078 = vpop.permute.xlu0 %1077
    %v1080 = vadd.f32 %v1070, %v1078
    %v1081 = vtanh.pop %v1080
    %1083 = vrot.lane.b32.xlu0 %v1081, 32
    %v1084 = vpop.permute.xlu0 %1083
    %v1086 = vmul.f32 %v1069, %v1084
    %v1087 = vadd.f32 %v980, %v1086
    %1089 = vrot.lane.b32.xlu0 %v1086, 80
    %v1090 = vpop.permute.xlu0 %1089
    %v1091 = vsel %vm316, %v1090, 0
    %1093 = vmatprep.subr.mxu0 0.0
    %1094 = vmatpush1.msra.mxu0 0.0
    %1095 = vmatprep.subr.mxu0 0.0
    %1096 = vmatpush1.msra.mxu0 0.0
    %1097 = vmatprep.subr.mxu0 0.0
    %1098 = vmatpush1.msra.mxu0 0.0
    %1099 = vmatprep.subr.mxu0 0.0
    %1100 = vmatpush1.msra.mxu0 0.0
    %1101 = vmatprep.subr.mxu0 0.0
    %1102 = vmatpush1.msra.mxu0 0.0
    %1103 = vmatprep.subr.mxu0 0.0
    %1104 = vmatpush1.msra.mxu0 0.0
    %1105 = vmatprep.subr.mxu0 0.0
    %1106 = vmatpush1.msra.mxu0 0.0
    %1107 = vmatprep.subr.mxu0 0.0
    %1108 = vmatpush1.msra.mxu0 0.0
    %1109 = vmatprep.subr.mxu0 0.0
    %1110 = vmatpush1.msra.mxu0 0.0
    %1111 = vmatprep.subr.mxu0 0.0
    %1112 = vmatpush1.msra.mxu0 0.0
    %1113 = vmatprep.subr.mxu0 0.0
    %1114 = vmatpush1.msra.mxu0 0.0
    %1115 = vmatprep.subr.mxu0 0.0
    %1116 = vmatpush1.msra.mxu0 0.0
    %1117 = vmatprep.subr.mxu0 0.0
    %1118 = vmatpush1.msra.mxu0 0.0
    %1119 = vmatprep.subr.mxu0 0.0
    %1120 = vmatpush1.msra.mxu0 0.0
    %1121 = vmatprep.subr.mxu0 0.0
    %1122 = vmatpush1.msra.mxu0 %v315
    %1123 = vmatprep.subr.mxu0 0.0
    %1124 = vmatpush1.msra.mxu0 %v314
    %1125 = vmatprep.subr.mxu0 0.0
    %1126 = vmatpush2.msra.mxu0 0.0
    %1127 = vmatprep.subr.mxu0 0.0
    %1128 = vmatpush2.msra.mxu0 0.0
    %1129 = vmatprep.subr.mxu0 0.0
    %1130 = vmatpush2.msra.mxu0 0.0
    %1131 = vmatprep.subr.mxu0 0.0
    %1132 = vmatpush2.msra.mxu0 0.0
    %1133 = vmatprep.subr.mxu0 0.0
    %1134 = vmatpush2.msra.mxu0 0.0
    %1135 = vmatprep.subr.mxu0 0.0
    %1136 = vmatpush2.msra.mxu0 0.0
    %1137 = vmatprep.subr.mxu0 0.0
    %1138 = vmatpush2.msra.mxu0 0.0
    %1139 = vmatprep.subr.mxu0 0.0
    %1140 = vmatpush2.msra.mxu0 0.0
    %1141 = vmatprep.subr.mxu0 0.0
    %1142 = vmatpush2.msra.mxu0 0.0
    %1143 = vmatprep.subr.mxu0 0.0
    %1144 = vmatpush2.msra.mxu0 0.0
    %1145 = vmatprep.subr.mxu0 0.0
    %1146 = vmatpush2.msra.mxu0 0.0
    %1147 = vmatprep.subr.mxu0 0.0
    %1148 = vmatpush2.msra.mxu0 0.0
    %1149 = vmatprep.subr.mxu0 0.0
    %1150 = vmatpush2.msra.mxu0 0.0
    %1151 = vmatprep.subr.mxu0 0.0
    %1152 = vmatpush2.msra.mxu0 0.0
    %1153 = vmatprep.subr.mxu0 0.0
    %1154 = vmatpush2.msra.mxu0 0.0
    %1155 = vmatprep.subr.mxu0 0.0
    %1156 = vmatpush2.msra.mxu0 0.0
    %1157 = vmatprep.mubr.f32.mxu0 0.0
    %1158 = vmatmul.mubr.f32.gmra.mxu0 %v1091
    %v1159 = vpop.f32.mrf.mxu0
    %v1160 = vadd.f32 0.0, %v1159
    %v1161 = vpop.f32.mrf.mxu0
    %1162 = vdwg.mxu0
    %v1163 = vadd.f32 %v438, %v1160
    %1165 = vrot.lane.b32.xlu0 %v1163, 64
    %v1166 = vpop.permute.xlu0 %1165
    %v1168 = vsel %vm521, %v1163, %v1166
    %v1169 = vtanh.pop %v1168
    %v1170 = vxor.u32 %v1168, 2147483648
    %v1171 = vmul.f32 %v1170, 1.442695
    %v1172 = vpow.pop %v1171
    %v1173 = vadd.f32 %v1172, 1.0
    %v1174 = vrcp.pop %v1173
    %v1175 = vmul.f32 1.0, %v1174
    %v1176 = vsel %vm303, %v1169, %v1175
    %v1177 = vmul.f32 %v1176, %v1080
    %1179 = vrot.lane.b32.xlu0 %v1176, 96
    %v1180 = vpop.permute.xlu0 %1179
    %v1182 = vmul.f32 %v1176, %v1180
    %1184 = vrot.lane.b32.xlu0 %v1182, 16
    %v1185 = vpop.permute.xlu0 %1184
    %v1187 = vadd.f32 %v1177, %v1185
    %v1188 = vtanh.pop %v1187
    %1190 = vrot.lane.b32.xlu0 %v1188, 32
    %v1191 = vpop.permute.xlu0 %1190
    %v1193 = vmul.f32 %v1176, %v1191
    %v1194 = vadd.f32 %v1087, %v1193
    %1196 = vrot.lane.b32.xlu0 %v1193, 80
    %v1197 = vpop.permute.xlu0 %1196
    %v1198 = vsel %vm316, %v1197, 0
    %1200 = vmatprep.subr.mxu0 0.0
    %1201 = vmatpush1.msra.mxu0 0.0
    %1202 = vmatprep.subr.mxu0 0.0
    %1203 = vmatpush1.msra.mxu0 0.0
    %1204 = vmatprep.subr.mxu0 0.0
    %1205 = vmatpush1.msra.mxu0 0.0
    %1206 = vmatprep.subr.mxu0 0.0
    %1207 = vmatpush1.msra.mxu0 0.0
    %1208 = vmatprep.subr.mxu0 0.0
    %1209 = vmatpush1.msra.mxu0 0.0
    %1210 = vmatprep.subr.mxu0 0.0
    %1211 = vmatpush1.msra.mxu0 0.0
    %1212 = vmatprep.subr.mxu0 0.0
    %1213 = vmatpush1.msra.mxu0 0.0
    %1214 = vmatprep.subr.mxu0 0.0
    %1215 = vmatpush1.msra.mxu0 0.0
    %1216 = vmatprep.subr.mxu0 0.0
    %1217 = vmatpush1.msra.mxu0 0.0
    %1218 = vmatprep.subr.mxu0 0.0
    %1219 = vmatpush1.msra.mxu0 0.0
    %1220 = vmatprep.subr.mxu0 0.0
    %1221 = vmatpush1.msra.mxu0 0.0
    %1222 = vmatprep.subr.mxu0 0.0
    %1223 = vmatpush1.msra.mxu0 0.0
    %1224 = vmatprep.subr.mxu0 0.0
    %1225 = vmatpush1.msra.mxu0 0.0
    %1226 = vmatprep.subr.mxu0 0.0
    %1227 = vmatpush1.msra.mxu0 0.0
    %1228 = vmatprep.subr.mxu0 0.0
    %1229 = vmatpush1.msra.mxu0 %v315
    %1230 = vmatprep.subr.mxu0 0.0
    %1231 = vmatpush1.msra.mxu0 %v314
    %1232 = vmatprep.subr.mxu0 0.0
    %1233 = vmatpush2.msra.mxu0 0.0
    %1234 = vmatprep.subr.mxu0 0.0
    %1235 = vmatpush2.msra.mxu0 0.0
    %1236 = vmatprep.subr.mxu0 0.0
    %1237 = vmatpush2.msra.mxu0 0.0
    %1238 = vmatprep.subr.mxu0 0.0
    %1239 = vmatpush2.msra.mxu0 0.0
    %1240 = vmatprep.subr.mxu0 0.0
    %1241 = vmatpush2.msra.mxu0 0.0
    %1242 = vmatprep.subr.mxu0 0.0
    %1243 = vmatpush2.msra.mxu0 0.0
    %1244 = vmatprep.subr.mxu0 0.0
    %1245 = vmatpush2.msra.mxu0 0.0
    %1246 = vmatprep.subr.mxu0 0.0
    %1247 = vmatpush2.msra.mxu0 0.0
    %1248 = vmatprep.subr.mxu0 0.0
    %1249 = vmatpush2.msra.mxu0 0.0
    %1250 = vmatprep.subr.mxu0 0.0
    %1251 = vmatpush2.msra.mxu0 0.0
    %1252 = vmatprep.subr.mxu0 0.0
    %1253 = vmatpush2.msra.mxu0 0.0
    %1254 = vmatprep.subr.mxu0 0.0
    %1255 = vmatpush2.msra.mxu0 0.0
    %1256 = vmatprep.subr.mxu0 0.0
    %1257 = vmatpush2.msra.mxu0 0.0
    %1258 = vmatprep.subr.mxu0 0.0
    %1259 = vmatpush2.msra.mxu0 0.0
    %1260 = vmatprep.subr.mxu0 0.0
    %1261 = vmatpush2.msra.mxu0 0.0
    %1262 = vmatprep.subr.mxu0 0.0
    %1263 = vmatpush2.msra.mxu0 0.0
    %1264 = vmatprep.mubr.f32.mxu0 0.0
    %1265 = vmatmul.mubr.f32.gmra.mxu0 %v1198
    %v1266 = vpop.f32.mrf.mxu0
    %v1267 = vadd.f32 0.0, %v1266
    %v1268 = vpop.f32.mrf.mxu0
    %1269 = vdwg.mxu0
    %v1270 = vadd.f32 %v443, %v1267
    %1272 = vrot.lane.b32.xlu0 %v1270, 64
    %v1273 = vpop.permute.xlu0 %1272
    %v1275 = vsel %vm521, %v1270, %v1273
    %v1276 = vtanh.pop %v1275
    %v1277 = vxor.u32 %v1275, 2147483648
    %v1278 = vmul.f32 %v1277, 1.442695
    %v1279 = vpow.pop %v1278
    %v1280 = vadd.f32 %v1279, 1.0
    %v1281 = vrcp.pop %v1280
    %v1282 = vmul.f32 1.0, %v1281
    %v1283 = vsel %vm303, %v1276, %v1282
    %v1284 = vmul.f32 %v1283, %v1187
    %1286 = vrot.lane.b32.xlu0 %v1283, 96
    %v1287 = vpop.permute.xlu0 %1286
    %v1289 = vmul.f32 %v1283, %v1287
    %1291 = vrot.lane.b32.xlu0 %v1289, 16
    %v1292 = vpop.permute.xlu0 %1291
    %v1294 = vadd.f32 %v1284, %v1292
    %v1295 = vtanh.pop %v1294
    %1297 = vrot.lane.b32.xlu0 %v1295, 32
    %v1298 = vpop.permute.xlu0 %1297
    %v1300 = vmul.f32 %v1283, %v1298
    %v1301 = vadd.f32 %v1194, %v1300
    %1303 = vrot.lane.b32.xlu0 %v1301, 80
    %v1304 = vpop.permute.xlu0 %1303
    %v1306 = vrot.slane %v1301, 4
    %1307 = vrot.lane.b32.xlu0 %v1306, 96
    %v1308 = vpop.permute.xlu0 %1307
    %v1310 = vsel %vm316, %v1304, %v1308
    %v1311 = vmul.f32 %v1310, 0.125
    %v1312 = vld [vmem:[%s5] sm:$0xff]
    %v1313 = vld [vmem:[%s5 + $0x8] sm:$0xff]
    %v1314 = vld [vmem:[%s5 + $0x10] sm:$0xff]
    %v1315 = vld [vmem:[%s5 + $0x18] sm:$0xff]
    %v1316 = vld [vmem:[%s5 + $0x20] sm:$0x1]
    %1321 = vrot.lane.b32.xlu0 %v1312, 96
    %v1322 = vpop.permute.xlu0 %1321
    %1323 = vrot.lane.b32.xlu0 %v1313, 96
    %v1324 = vpop.permute.xlu0 %1323
    %1325 = vrot.lane.b32.xlu0 %v1314, 96
    %v1326 = vpop.permute.xlu0 %1325
    %1327 = vrot.lane.b32.xlu0 %v1315, 96
    %v1328 = vpop.permute.xlu0 %1327
    %v1334 = vsel %vm75, %v1311, 0
    %1336 = vmatprep.subr.mxu0 0.0
    %1337 = vmatpush1.msra.mxu0 0.0
    %1338 = vmatprep.subr.mxu0 0.0
    %1339 = vmatpush1.msra.mxu0 0.0
    %1340 = vmatprep.subr.mxu0 0.0
    %1341 = vmatpush1.msra.mxu0 0.0
    %1342 = vmatprep.subr.mxu0 0.0
    %1343 = vmatpush1.msra.mxu0 0.0
    %1344 = vmatprep.subr.mxu0 0.0
    %1345 = vmatpush1.msra.mxu0 0.0
    %1346 = vmatprep.subr.mxu0 0.0
    %1347 = vmatpush1.msra.mxu0 0.0
    %1348 = vmatprep.subr.mxu0 0.0
    %1349 = vmatpush1.msra.mxu0 0.0
    %1350 = vmatprep.subr.mxu0 0.0
    %1351 = vmatpush1.msra.mxu0 0.0
    %1352 = vmatprep.subr.mxu0 0.0
    %1353 = vmatpush1.msra.mxu0 0.0
    %1354 = vmatprep.subr.mxu0 0.0
    %1355 = vmatpush1.msra.mxu0 0.0
    %1356 = vmatprep.subr.mxu0 0.0
    %1357 = vmatpush1.msra.mxu0 0.0
    %1358 = vmatprep.subr.mxu0 0.0
    %1359 = vmatpush1.msra.mxu0 0.0
    %1360 = vmatprep.subr.mxu0 0.0
    %1361 = vmatpush1.msra.mxu0 %v1328
    %1362 = vmatprep.subr.mxu0 0.0
    %1363 = vmatpush1.msra.mxu0 %v1326
    %1364 = vmatprep.subr.mxu0 0.0
    %1365 = vmatpush1.msra.mxu0 %v1324
    %1366 = vmatprep.subr.mxu0 0.0
    %1367 = vmatpush1.msra.mxu0 %v1322
    %1368 = vmatprep.subr.mxu0 0.0
    %1369 = vmatpush2.msra.mxu0 0.0
    %1370 = vmatprep.subr.mxu0 0.0
    %1371 = vmatpush2.msra.mxu0 0.0
    %1372 = vmatprep.subr.mxu0 0.0
    %1373 = vmatpush2.msra.mxu0 0.0
    %1374 = vmatprep.subr.mxu0 0.0
    %1375 = vmatpush2.msra.mxu0 0.0
    %1376 = vmatprep.subr.mxu0 0.0
    %1377 = vmatpush2.msra.mxu0 0.0
    %1378 = vmatprep.subr.mxu0 0.0
    %1379 = vmatpush2.msra.mxu0 0.0
    %1380 = vmatprep.subr.mxu0 0.0
    %1381 = vmatpush2.msra.mxu0 0.0
    %1382 = vmatprep.subr.mxu0 0.0
    %1383 = vmatpush2.msra.mxu0 0.0
    %1384 = vmatprep.subr.mxu0 0.0
    %1385 = vmatpush2.msra.mxu0 0.0
    %1386 = vmatprep.subr.mxu0 0.0
    %1387 = vmatpush2.msra.mxu0 0.0
    %1388 = vmatprep.subr.mxu0 0.0
    %1389 = vmatpush2.msra.mxu0 0.0
    %1390 = vmatprep.subr.mxu0 0.0
    %1391 = vmatpush2.msra.mxu0 0.0
    %1392 = vmatprep.subr.mxu0 0.0
    %1393 = vmatpush2.msra.mxu0 0.0
    %1394 = vmatprep.subr.mxu0 0.0
    %1395 = vmatpush2.msra.mxu0 0.0
    %1396 = vmatprep.subr.mxu0 0.0
    %1397 = vmatpush2.msra.mxu0 0.0
    %1398 = vmatprep.subr.mxu0 0.0
    %1399 = vmatpush2.msra.mxu0 0.0
    %1400 = vmatprep.mubr.f32.mxu0 0.0
    %1401 = vmatmul.mubr.f32.gmra.mxu0 %v1334
    %v1402 = vpop.f32.mrf.mxu0
    %v1403 = vadd.f32 0.0, %v1402
    %v1404 = vpop.f32.mrf.mxu0
    %1405 = vdwg.mxu0
    %v1407 = vsel %vm75, %v297, 0
    %1409 = vmatprep.subr.mxu0 0.0
    %1410 = vmatpush1.msra.mxu0 0.0
    %1411 = vmatprep.subr.mxu0 0.0
    %1412 = vmatpush1.msra.mxu0 0.0
    %1413 = vmatprep.subr.mxu0 0.0
    %1414 = vmatpush1.msra.mxu0 0.0
    %1415 = vmatprep.subr.mxu0 0.0
    %1416 = vmatpush1.msra.mxu0 0.0
    %1417 = vmatprep.subr.mxu0 0.0
    %1418 = vmatpush1.msra.mxu0 0.0
    %1419 = vmatprep.subr.mxu0 0.0
    %1420 = vmatpush1.msra.mxu0 0.0
    %1421 = vmatprep.subr.mxu0 0.0
    %1422 = vmatpush1.msra.mxu0 0.0
    %1423 = vmatprep.subr.mxu0 0.0
    %1424 = vmatpush1.msra.mxu0 0.0
    %1425 = vmatprep.subr.mxu0 0.0
    %1426 = vmatpush1.msra.mxu0 0.0
    %1427 = vmatprep.subr.mxu0 0.0
    %1428 = vmatpush1.msra.mxu0 0.0
    %1429 = vmatprep.subr.mxu0 0.0
    %1430 = vmatpush1.msra.mxu0 0.0
    %1431 = vmatprep.subr.mxu0 0.0
    %1432 = vmatpush1.msra.mxu0 0.0
    %1433 = vmatprep.subr.mxu0 0.0
    %1434 = vmatpush1.msra.mxu0 %v1315
    %1435 = vmatprep.subr.mxu0 0.0
    %1436 = vmatpush1.msra.mxu0 %v1314
    %1437 = vmatprep.subr.mxu0 0.0
    %1438 = vmatpush1.msra.mxu0 %v1313
    %1439 = vmatprep.subr.mxu0 0.0
    %1440 = vmatpush1.msra.mxu0 %v1312
    %1441 = vmatprep.subr.mxu0 0.0
    %1442 = vmatpush2.msra.mxu0 0.0
    %1443 = vmatprep.subr.mxu0 0.0
    %1444 = vmatpush2.msra.mxu0 0.0
    %1445 = vmatprep.subr.mxu0 0.0
    %1446 = vmatpush2.msra.mxu0 0.0
    %1447 = vmatprep.subr.mxu0 0.0
    %1448 = vmatpush2.msra.mxu0 0.0
    %1449 = vmatprep.subr.mxu0 0.0
    %1450 = vmatpush2.msra.mxu0 0.0
    %1451 = vmatprep.subr.mxu0 0.0
    %1452 = vmatpush2.msra.mxu0 0.0
    %1453 = vmatprep.subr.mxu0 0.0
    %1454 = vmatpush2.msra.mxu0 0.0
    %1455 = vmatprep.subr.mxu0 0.0
    %1456 = vmatpush2.msra.mxu0 0.0
    %1457 = vmatprep.subr.mxu0 0.0
    %1458 = vmatpush2.msra.mxu0 0.0
    %1459 = vmatprep.subr.mxu0 0.0
    %1460 = vmatpush2.msra.mxu0 0.0
    %1461 = vmatprep.subr.mxu0 0.0
    %1462 = vmatpush2.msra.mxu0 0.0
    %1463 = vmatprep.subr.mxu0 0.0
    %1464 = vmatpush2.msra.mxu0 0.0
    %1465 = vmatprep.subr.mxu0 0.0
    %1466 = vmatpush2.msra.mxu0 0.0
    %1467 = vmatprep.subr.mxu0 0.0
    %1468 = vmatpush2.msra.mxu0 0.0
    %1469 = vmatprep.subr.mxu0 0.0
    %1470 = vmatpush2.msra.mxu0 0.0
    %1471 = vmatprep.subr.mxu0 0.0
    %1472 = vmatpush2.msra.mxu0 0.0
    %1473 = vmatprep.mubr.f32.mxu0 0.0
    %1474 = vmatmul.mubr.f32.gmra.mxu0 %v1407
    %v1475 = vpop.f32.mrf.mxu0
    %v1476 = vadd.f32 %v1403, %v1475
    %v1477 = vpop.f32.mrf.mxu0
    %1478 = vdwg.mxu0
    %v1479 = vlaneseq
    %v1480 = vshrl.u32 %v1479, 7
    %v1481 = vsub.s32 0, %v1480
    %v1482 = vrot.slane %v1316, %v1481
    %v1483 = vadd.f32 %v1476, %v1482
    %v1484 = vxor.u32 %v1483, 2147483648
    %v1485 = vmul.f32 %v1484, 1.442695
    %v1486 = vpow.pop %v1485
    %v1487 = vadd.f32 %v1486, 1.0
    %v1488 = vrcp.pop %v1487
    %v1489 = vmul.f32 1.0, %v1488
    %v1490 = vmul.f32 %v1489, %v297
    %v1491 = vsub.f32 1.0, %v1489
    %v1492 = vmul.f32 %v1491, %v1311
    %v1493 = vadd.f32 %v1490, %v1492
    %1494 = vrot.lane.b32.xlu0 %v1312, 64
    %v1495 = vpop.permute.xlu0 %1494
    %1496 = vrot.lane.b32.xlu0 %v1313, 64
    %v1497 = vpop.permute.xlu0 %1496
    %1498 = vrot.lane.b32.xlu0 %v1314, 64
    %v1499 = vpop.permute.xlu0 %1498
    %1500 = vrot.lane.b32.xlu0 %v1315, 64
    %v1501 = vpop.permute.xlu0 %1500
    %1507 = vrot.lane.b32.xlu0 %v1482, 96
    %v1508 = vpop.permute.xlu0 %1507
    %v1511 = vsel %vm75, %v1493, 0
    %1513 = vmatprep.subr.mxu0 0.0
    %1514 = vmatpush1.msra.mxu0 0.0
    %1515 = vmatprep.subr.mxu0 0.0
    %1516 = vmatpush1.msra.mxu0 0.0
    %1517 = vmatprep.subr.mxu0 0.0
    %1518 = vmatpush1.msra.mxu0 0.0
    %1519 = vmatprep.subr.mxu0 0.0
    %1520 = vmatpush1.msra.mxu0 0.0
    %1521 = vmatprep.subr.mxu0 0.0
    %1522 = vmatpush1.msra.mxu0 0.0
    %1523 = vmatprep.subr.mxu0 0.0
    %1524 = vmatpush1.msra.mxu0 0.0
    %1525 = vmatprep.subr.mxu0 0.0
    %1526 = vmatpush1.msra.mxu0 0.0
    %1527 = vmatprep.subr.mxu0 0.0
    %1528 = vmatpush1.msra.mxu0 0.0
    %1529 = vmatprep.subr.mxu0 0.0
    %1530 = vmatpush1.msra.mxu0 0.0
    %1531 = vmatprep.subr.mxu0 0.0
    %1532 = vmatpush1.msra.mxu0 0.0
    %1533 = vmatprep.subr.mxu0 0.0
    %1534 = vmatpush1.msra.mxu0 0.0
    %1535 = vmatprep.subr.mxu0 0.0
    %1536 = vmatpush1.msra.mxu0 0.0
    %1537 = vmatprep.subr.mxu0 0.0
    %1538 = vmatpush1.msra.mxu0 %v1501
    %1539 = vmatprep.subr.mxu0 0.0
    %1540 = vmatpush1.msra.mxu0 %v1499
    %1541 = vmatprep.subr.mxu0 0.0
    %1542 = vmatpush1.msra.mxu0 %v1497
    %1543 = vmatprep.subr.mxu0 0.0
    %1544 = vmatpush1.msra.mxu0 %v1495
    %1545 = vmatprep.subr.mxu0 0.0
    %1546 = vmatpush2.msra.mxu0 0.0
    %1547 = vmatprep.subr.mxu0 0.0
    %1548 = vmatpush2.msra.mxu0 0.0
    %1549 = vmatprep.subr.mxu0 0.0
    %1550 = vmatpush2.msra.mxu0 0.0
    %1551 = vmatprep.subr.mxu0 0.0
    %1552 = vmatpush2.msra.mxu0 0.0
    %1553 = vmatprep.subr.mxu0 0.0
    %1554 = vmatpush2.msra.mxu0 0.0
    %1555 = vmatprep.subr.mxu0 0.0
    %1556 = vmatpush2.msra.mxu0 0.0
    %1557 = vmatprep.subr.mxu0 0.0
    %1558 = vmatpush2.msra.mxu0 0.0
    %1559 = vmatprep.subr.mxu0 0.0
    %1560 = vmatpush2.msra.mxu0 0.0
    %1561 = vmatprep.subr.mxu0 0.0
    %1562 = vmatpush2.msra.mxu0 0.0
    %1563 = vmatprep.subr.mxu0 0.0
    %1564 = vmatpush2.msra.mxu0 0.0
    %1565 = vmatprep.subr.mxu0 0.0
    %1566 = vmatpush2.msra.mxu0 0.0
    %1567 = vmatprep.subr.mxu0 0.0
    %1568 = vmatpush2.msra.mxu0 0.0
    %1569 = vmatprep.subr.mxu0 0.0
    %1570 = vmatpush2.msra.mxu0 0.0
    %1571 = vmatprep.subr.mxu0 0.0
    %1572 = vmatpush2.msra.mxu0 0.0
    %1573 = vmatprep.subr.mxu0 0.0
    %1574 = vmatpush2.msra.mxu0 0.0
    %1575 = vmatprep.subr.mxu0 0.0
    %1576 = vmatpush2.msra.mxu0 0.0
    %1577 = vmatprep.mubr.f32.mxu0 0.0
    %1578 = vmatmul.mubr.f32.gmra.mxu0 %v1511
    %v1579 = vpop.f32.mrf.mxu0
    %v1580 = vadd.f32 %v1508, %v1579
    %v1581 = vpop.f32.mrf.mxu0
    %1582 = vdwg.mxu0
    %v1583 = vtanh.pop %v1580
    %1584 = vrot.lane.b32.xlu0 %v1312, 32
    %v1585 = vpop.permute.xlu0 %1584
    %1586 = vrot.lane.b32.xlu0 %v1313, 32
    %v1587 = vpop.permute.xlu0 %1586
    %1588 = vrot.lane.b32.xlu0 %v1314, 32
    %v1589 = vpop.permute.xlu0 %1588
    %1590 = vrot.lane.b32.xlu0 %v1315, 32
    %v1591 = vpop.permute.xlu0 %1590
    %1596 = vrot.lane.b32.xlu0 %v1482, 64
    %v1597 = vpop.permute.xlu0 %1596
    %v1600 = vsel %vm75, %v1583, 0
    %1602 = vmatprep.subr.mxu0 0.0
    %1603 = vmatpush1.msra.mxu0 0.0
    %1604 = vmatprep.subr.mxu0 0.0
    %1605 = vmatpush1.msra.mxu0 0.0
    %1606 = vmatprep.subr.mxu0 0.0
    %1607 = vmatpush1.msra.mxu0 0.0
    %1608 = vmatprep.subr.mxu0 0.0
    %1609 = vmatpush1.msra.mxu0 0.0
    %1610 = vmatprep.subr.mxu0 0.0
    %1611 = vmatpush1.msra.mxu0 0.0
    %1612 = vmatprep.subr.mxu0 0.0
    %1613 = vmatpush1.msra.mxu0 0.0
    %1614 = vmatprep.subr.mxu0 0.0
    %1615 = vmatpush1.msra.mxu0 0.0
    %1616 = vmatprep.subr.mxu0 0.0
    %1617 = vmatpush1.msra.mxu0 0.0
    %1618 = vmatprep.subr.mxu0 0.0
    %1619 = vmatpush1.msra.mxu0 0.0
    %1620 = vmatprep.subr.mxu0 0.0
    %1621 = vmatpush1.msra.mxu0 0.0
    %1622 = vmatprep.subr.mxu0 0.0
    %1623 = vmatpush1.msra.mxu0 0.0
    %1624 = vmatprep.subr.mxu0 0.0
    %1625 = vmatpush1.msra.mxu0 0.0
    %1626 = vmatprep.subr.mxu0 0.0
    %1627 = vmatpush1.msra.mxu0 %v1591
    %1628 = vmatprep.subr.mxu0 0.0
    %1629 = vmatpush1.msra.mxu0 %v1589
    %1630 = vmatprep.subr.mxu0 0.0
    %1631 = vmatpush1.msra.mxu0 %v1587
    %1632 = vmatprep.subr.mxu0 0.0
    %1633 = vmatpush1.msra.mxu0 %v1585
    %1634 = vmatprep.subr.mxu0 0.0
    %1635 = vmatpush2.msra.mxu0 0.0
    %1636 = vmatprep.subr.mxu0 0.0
    %1637 = vmatpush2.msra.mxu0 0.0
    %1638 = vmatprep.subr.mxu0 0.0
    %1639 = vmatpush2.msra.mxu0 0.0
    %1640 = vmatprep.subr.mxu0 0.0
    %1641 = vmatpush2.msra.mxu0 0.0
    %1642 = vmatprep.subr.mxu0 0.0
    %1643 = vmatpush2.msra.mxu0 0.0
    %1644 = vmatprep.subr.mxu0 0.0
    %1645 = vmatpush2.msra.mxu0 0.0
    %1646 = vmatprep.subr.mxu0 0.0
    %1647 = vmatpush2.msra.mxu0 0.0
    %1648 = vmatprep.subr.mxu0 0.0
    %1649 = vmatpush2.msra.mxu0 0.0
    %1650 = vmatprep.subr.mxu0 0.0
    %1651 = vmatpush2.msra.mxu0 0.0
    %1652 = vmatprep.subr.mxu0 0.0
    %1653 = vmatpush2.msra.mxu0 0.0
    %1654 = vmatprep.subr.mxu0 0.0
    %1655 = vmatpush2.msra.mxu0 0.0
    %1656 = vmatprep.subr.mxu0 0.0
    %1657 = vmatpush2.msra.mxu0 0.0
    %1658 = vmatprep.subr.mxu0 0.0
    %1659 = vmatpush2.msra.mxu0 0.0
    %1660 = vmatprep.subr.mxu0 0.0
    %1661 = vmatpush2.msra.mxu0 0.0
    %1662 = vmatprep.subr.mxu0 0.0
    %1663 = vmatpush2.msra.mxu0 0.0
    %1664 = vmatprep.subr.mxu0 0.0
    %1665 = vmatpush2.msra.mxu0 0.0
    %1666 = vmatprep.mubr.f32.mxu0 0.0
    %1667 = vmatmul.mubr.f32.gmra.mxu0 %v1600
    %v1668 = vpop.f32.mrf.mxu0
    %v1669 = vadd.f32 %v1597, %v1668
    %v1670 = vpop.f32.mrf.mxu0
    %1671 = vdwg.mxu0
    %v1672 = vxor.u32 %v1669, 2147483648
    %v1673 = vmul.f32 %v1672, 1.442695
    %v1674 = vpow.pop %v1673
    %v1675 = vadd.f32 %v1674, 1.0
    %v1676 = vrcp.pop %v1675
    %v1677 = vmul.f32 1.0, %v1676
    %vm1678 = vcmask 257024
    %1679 = vst.msk [vmem:[#allocation5] sm:$0xf] %vm1678, %v1493
    %vm1680 = vcmask 3072
    %1681 = vst.msk [vmem:[%s7] sm:$0xf] %vm1680, %v1677
    // Predicated region
    $region30: #{rast_eval_forward.1} parent=1 // pred_check
      _
    $region31: #{rast_eval_forward.1} parent=1 // pred_check_branch
      %1683 = sbr.rel (0) target = $region33
    $region32: #{rast_eval_forward.1} parent=1 // pred_region
      %s1685 = ssub.s32 64, 64
      %1686 = vsyncadd [#allocation3], %s1685
      %s1688 = sshll.u32 [#allocation5], 4
      %s1689 = int_to_ptr.vmem [resolvable:$true] %s1688
      %1691 = dma.vmem_to_hbm [thread:$0]  %s1689, 64, %s6, [#allocation3]
    $region33: #{rast_eval_forward.1} parent=1 // pred_fallthru
      _
    // Predicated region
    $region34: #{rast_eval_forward.1} parent=1 // pred_check
      _
    $region35: #{rast_eval_forward.1} parent=1 // pred_check_branch
      %1693 = sbr.rel (0) target = $region37
    $region36: #{rast_eval_forward.1} parent=1 // pred_region
      _
    $region37: #{rast_eval_forward.1} parent=1 // pred_fallthru
      _
    // Predicated region
    $region38: #{rast_eval_forward.1} parent=1 // pred_check
      _
    $region39: #{rast_eval_forward.1} parent=1 // pred_check_branch
      %1695 = sbr.rel (0) target = $region41
    $region40: #{rast_eval_forward.1} parent=1 // pred_region
      %1696 = dma.done [#allocation3], 64
    $region41: #{rast_eval_forward.1} parent=1 // pred_fallthru
      _
    // Predicated region
    $region42: #{rast_eval_forward.1} parent=1 // pred_check
      _
    $region43: #{rast_eval_forward.1} parent=1 // pred_check_branch
      %1698 = sbr.rel (0) target = $region45
    $region44: #{rast_eval_forward.1} parent=1 // pred_region
      _
    $region45: #{rast_eval_forward.1} parent=1 // pred_fallthru
      _
    %1699 = vsyncpa [#allocation3], 1
    %1700 = vsyncpa [#allocation4], 1

</llo_original>
